<compile_context>
chip_gen: v6e
topology: v6e:2x2x1
jax: 0.10.0
libtpu: 0.0.40
codegen_flags: <defaults>
</compile_context>

<pallas_src>
import functools
import math

import jax
import jax.numpy as jnp
import numpy as np
from jax import lax
from jax.experimental import pallas as pl
from jax.experimental.pallas import tpu as pltpu

MAX_ITER = 1000           # optimize(..., max_iter=int(1000.0))
MAX_STABLE_ITER = 10
ZETA = 1e-6
LOSS_TOL = 1e-10          # NOTE: below f32 resolution of typical loss sums; kept to
                          # mirror the PyTorch code (which compares in float64).
CHUNK = 20                # iterations per early-exit check
UNROLL = 5                # manual unroll inside the chunk loop
NUM_CHUNKS = MAX_ITER // CHUNK
assert MAX_ITER % CHUNK == 0 and CHUNK % UNROLL == 0


# ---------------------------------------------------------------------------
# Pallas kernel
# ---------------------------------------------------------------------------
def _rbr_kernel(c_ref, denom_ref, numer_ref,
                u0_ref, u1_ref, s0_ref, s1_ref,
                mpe_ref, mop_ref, nspe_ref, nsop_ref, dpe_ref, dop_ref,
                *, n_pos, n_neg, sigma, p, eps_pe, eps_op):
    nt = c_ref.shape[1]

    sqrt_p = math.sqrt(p)
    step = 1.0 / math.sqrt(float(MAX_ITER))
    inv_pm1 = 1.0 / (p - 1.0)
    op_logc = (p - 1.0) * math.log(sigma)      # optimistic constant (p-1)*log(sigma)
    radius_pe = eps_pe / sqrt_p                # PessimisticLikelihood.projection
    radius_op = eps_op                         # OptimisticLikelihood.projection

    lane = lax.broadcasted_iota(jnp.int32, (1, nt), 1)
    is_pe = lane < n_pos
    is_op = jnp.logical_and(lane >= n_pos, lane < n_pos + n_neg)

    q_lane = jnp.where(is_pe, sqrt_p, -1.0)    # a = c + q * u0
    s_lane = jnp.where(is_pe, -1.0, 1.0)       # sign of log(d) + a^2/(2 d^2)
    r_lane = jnp.where(is_pe, radius_pe, radius_op)

    c = c_ref[...]                             # (1, nt), precomputed in wrapper

    def forward(u0, u1, approx):
        """Unified pe/op likelihood: per-lane (L, grad_u0, grad_u1)."""
        d = u1 + sigma
        inv_d = pl.reciprocal(d, approx=True) if approx else 1.0 / d
        inv_d2 = inv_d * inv_d
        a = c + q_lane * u0
        a2 = a * a
        # pessimistic-only f term; clamp keeps op/pad lanes NaN-free (the inf
        # branch is masked by the selects below — keep these as selects).
        farg = jnp.maximum(ZETA + eps_pe * eps_pe - p * u0 * u0 - u1 * u1, 0.0)
        f = jnp.sqrt(farg * inv_pm1)
        fs = f + sigma
        ffs = f * fs
        inv_ff = pl.reciprocal(ffs, approx=True) if approx else 1.0 / ffs
        L = s_lane * (jnp.log(d) + 0.5 * a2 * inv_d2) + jnp.where(
            is_pe, -(p - 1.0) * jnp.log(fs), op_logc)
        g0 = s_lane * q_lane * a * inv_d2 + jnp.where(is_pe, -p * u0 * inv_ff, 0.0)
        g1 = s_lane * (inv_d - a2 * inv_d2 * inv_d) + jnp.where(is_pe, u1 * inv_ff, 0.0)
        return L, g0, g1

    def book(min_loss, ns, done, ls):
        """Early-stop bookkeeping for one likelihood ((1,1) tiles)."""
        stable = (min_loss - ls) <= LOSS_TOL
        ns_new = jnp.where(stable, ns + 1, 0)
        broke = ns_new >= MAX_STABLE_ITER
        # min_loss is NOT updated in the iteration where the break fires
        # (mirrors the PyTorch loop order: break happens before the min update).
        min_new = jnp.where(broke, min_loss, jnp.minimum(min_loss, ls))
        alive = done == 0
        return (jnp.where(alive, min_new, min_loss),
                jnp.where(alive, ns_new, ns),
                jnp.where(alive, broke.astype(done.dtype), done))

    # ---- init persistent optimizer state (single kernel invocation) ----
    z = jnp.zeros((1, nt), jnp.float32)
    u0_ref[...] = z
    u1_ref[...] = z
    s0_ref[...] = z
    s1_ref[...] = z
    inf11 = jnp.full((1, 1), jnp.inf, jnp.float32)
    mpe_ref[...] = inf11
    mop_ref[...] = inf11
    zi = jnp.zeros((1, 1), jnp.int32)
    nspe_ref[...] = zi
    nsop_ref[...] = zi
    dpe_ref[...] = zi
    dop_ref[...] = zi

    def iter_body(st):
        u0, u1, s0, s1, mpe, mop, nspe, nsop, dpe, dop = st
        L, g0, g1 = forward(u0, u1, approx=True)
        # projected gradient step; u advances unconditionally so the
        # early-stop bookkeeping never feeds the serial u-update chain.
        n0 = jnp.maximum(u0 - step * g0, 0.0)
        n1 = jnp.maximum(u1 - step * g1, 0.0)
        scale = jnp.minimum(1.0, r_lane * lax.rsqrt(n0 * n0 + n1 * n1))
        n0 = n0 * scale
        n1 = n1 * scale
        # snapshot of the iterate at each likelihood's break point.
        done_lane = jnp.where(is_pe, dpe, dop) > 0
        s0n = jnp.where(done_lane, s0, n0)
        s1n = jnp.where(done_lane, s1, n1)
        # early-stop bookkeeping (parallel side chain, (1,1) tiles).
        ls_pe = jnp.sum(jnp.where(is_pe, L, 0.0), axis=1, keepdims=True)
        ls_op = jnp.sum(jnp.where(is_op, L, 0.0), axis=1, keepdims=True)
        mpe2, nspe2, dpe2 = book(mpe, nspe, dpe, ls_pe)
        mop2, nsop2, dop2 = book(mop, nsop, dop, ls_op)
        return (n0, n1, s0n, s1n, mpe2, mop2, nspe2, nsop2, dpe2, dop2)

    def unrolled(_, st):                       # manual UNROLL-deep unroll
        for _u in range(UNROLL):
            st = iter_body(st)
        return st

    # ---- single in-kernel chunk loop with early-exit guard ----
    @pl.loop(0, NUM_CHUNKS)
    def _chunks(chunk):
        done_both = jnp.logical_and(dpe_ref[0, 0] > 0, dop_ref[0, 0] > 0)

        @pl.when(jnp.logical_not(done_both))
        def _run():
            st0 = (u0_ref[...], u1_ref[...], s0_ref[...], s1_ref[...],
                   mpe_ref[...], mop_ref[...], nspe_ref[...], nsop_ref[...],
                   dpe_ref[...], dop_ref[...])
            st = lax.fori_loop(0, CHUNK // UNROLL, unrolled, st0)
            u0_ref[...], u1_ref[...] = st[0], st[1]
            s0_ref[...], s1_ref[...] = st[2], st[3]
            mpe_ref[...], mop_ref[...] = st[4], st[5]
            nspe_ref[...], nsop_ref[...] = st[6], st[7]
            dpe_ref[...], dop_ref[...] = st[8], st[9]

    # ---- finalize: *_likelihood._forward at the optimum (exact math) + LSE ----
    done_lane = jnp.where(is_pe, dpe_ref[...], dop_ref[...]) > 0
    u0 = jnp.where(done_lane, s0_ref[...], u0_ref[...])
    u1 = jnp.where(done_lane, s1_ref[...], u1_ref[...])
    L, _, _ = forward(u0, u1, approx=False)
    neg_inf = -jnp.inf
    f_pe = jnp.where(is_pe, L, neg_inf)                    # denom = lse(+L_pe)
    m_pe = jnp.max(f_pe, axis=1, keepdims=True)
    denom_ref[...] = m_pe + jnp.log(
        jnp.sum(jnp.exp(f_pe - m_pe), axis=1, keepdims=True))
    f_op = jnp.where(is_op, -L, neg_inf)                   # numer = lse(-L_op)
    m_op = jnp.max(f_op, axis=1, keepdims=True)
    numer_ref[...] = m_op + jnp.log(
        jnp.sum(jnp.exp(f_op - m_op), axis=1, keepdims=True))


# ---------------------------------------------------------------------------
# wrapper
# ---------------------------------------------------------------------------
def rbr_loss_forward(x, X_feas_pos, X_feas_neg, *, epsilon_op, epsilon_pe, sigma):
    """RBRLoss.forward(x) -> (result, denom, numer), one fused pallas_call."""
    x = jnp.asarray(x, jnp.float32)
    X_feas_pos = jnp.asarray(X_feas_pos, jnp.float32)
    X_feas_neg = jnp.asarray(X_feas_neg, jnp.float32)
    d_dim = x.shape[-1]
    n_pos = X_feas_pos.shape[0]
    n_neg = X_feas_neg.shape[0]
    nt = max(128, ((n_pos + n_neg + 127) // 128) * 128)   # lane-dense padding

    # precompute c = ||x - x_feas_i|| for both sets, packed on the lane axis
    c_pos = jnp.sqrt(jnp.sum((X_feas_pos - x[None, :]) ** 2, axis=-1))
    c_neg = jnp.sqrt(jnp.sum((X_feas_neg - x[None, :]) ** 2, axis=-1))
    c_row = jnp.zeros((1, nt), jnp.float32)
    c_row = c_row.at[0, :n_pos].set(c_pos)
    c_row = c_row.at[0, n_pos:n_pos + n_neg].set(c_neg)

    kernel = functools.partial(
        _rbr_kernel, n_pos=n_pos, n_neg=n_neg, sigma=float(sigma),
        p=float(d_dim), eps_pe=float(epsilon_pe), eps_op=float(epsilon_op))

    denom, numer = pl.pallas_call(
        kernel,
        out_shape=(jax.ShapeDtypeStruct((1, 1), jnp.float32),
                   jax.ShapeDtypeStruct((1, 1), jnp.float32)),
        grid=(1,),                              # single invocation; loop is in-kernel
        in_specs=[pl.BlockSpec((1, nt), lambda i: (0, 0))],
        out_specs=(pl.BlockSpec((1, 1), lambda i: (0, 0)),
                   pl.BlockSpec((1, 1), lambda i: (0, 0))),
        scratch_shapes=[
            pltpu.VMEM((1, nt), jnp.float32),   # u0
            pltpu.VMEM((1, nt), jnp.float32),   # u1
            pltpu.VMEM((1, nt), jnp.float32),   # u0 snapshot at break
            pltpu.VMEM((1, nt), jnp.float32),   # u1 snapshot at break
            pltpu.VMEM((1, 1), jnp.float32),    # min_loss   (pe)
            pltpu.VMEM((1, 1), jnp.float32),    # min_loss   (op)
            pltpu.VMEM((1, 1), jnp.int32),      # num_stable (pe)
            pltpu.VMEM((1, 1), jnp.int32),      # num_stable (op)
            pltpu.VMEM((1, 1), jnp.int32),      # done       (pe)
            pltpu.VMEM((1, 1), jnp.int32),      # done       (op)
        ],
        compiler_params=pltpu.CompilerParams(
            dimension_semantics=("arbitrary",)),
    )(c_row)

    denom_s = denom[0, 0]
    numer_s = numer[0, 0]
    return numer_s - denom_s, denom_s, numer_s


# ---------------------------------------------------------------------------
# pure-JAX reference (faithful transcription of the PyTorch module, no Pallas)
# ---------------------------------------------------------------------------
def _reference_likelihood(x, X_feas, *, mode, sigma, eps):
    x = jnp.asarray(x, jnp.float32)
    X_feas = jnp.asarray(X_feas, jnp.float32)
    p = float(X_feas.shape[-1])
    sqrt_p = math.sqrt(p)
    step = 1.0 / math.sqrt(float(MAX_ITER))
    c = jnp.sqrt(jnp.sum((X_feas - x[None, :]) ** 2, axis=-1))          # (N,)
    radius = eps / sqrt_p if mode == "pe" else eps

    def fwd(u0, u1):
        d = u1 + sigma
        if mode == "pe":
            f = jnp.sqrt((ZETA + eps * eps - p * u0 * u0 - u1 * u1) / (p - 1.0))
            a = c + sqrt_p * u0
            L = -jnp.log(d) - a * a / (2.0 * d * d) - (p - 1.0) * jnp.log(f + sigma)
            g0 = -sqrt_p * a / (d * d) - p * u0 / (f * (f + sigma))
            g1 = -1.0 / d + a * a / (d * d * d) + u1 / (f * (f + sigma))
        else:
            r = c - u0
            L = jnp.log(d) + r * r / (2.0 * d * d) + (p - 1.0) * math.log(sigma)
            g0 = -r / (d * d)
            g1 = 1.0 / d - r * r / (d * d * d)
        return L, g0, g1

    def body(_, st):
        u0, u1, min_loss, ns, done = st
        L, g0, g1 = fwd(u0, u1)
        n0 = jnp.maximum(u0 - step * g0, 0.0)
        n1 = jnp.maximum(u1 - step * g1, 0.0)
        norm = jnp.sqrt(n0 * n0 + n1 * n1)
        scale = radius / jnp.maximum(radius, norm)
        n0 = n0 * scale
        n1 = n1 * scale
        ls = jnp.sum(L)
        stable = (min_loss - ls) <= LOSS_TOL
        ns_new = jnp.where(stable, ns + 1, 0)
        broke = ns_new >= MAX_STABLE_ITER
        alive = done == 0
        min_new = jnp.where(broke, min_loss, jnp.minimum(min_loss, ls))
        return (jnp.where(alive, n0, u0), jnp.where(alive, n1, u1),
                jnp.where(alive, min_new, min_loss),
                jnp.where(alive, ns_new, ns),
                jnp.where(alive, broke.astype(jnp.int32), done))

    n = X_feas.shape[0]
    st = (jnp.zeros((n,), jnp.float32), jnp.zeros((n,), jnp.float32),
          jnp.float32(jnp.inf), jnp.int32(0), jnp.int32(0))
    u0, u1, _, _, _ = lax.fori_loop(0, MAX_ITER, body, st)
    L, _, _ = fwd(u0, u1)
    F = L if mode == "pe" else -L
    m = jnp.max(F)
    return m + jnp.log(jnp.sum(jnp.exp(F - m)))


if __name__ == "__main__":
    key = jax.random.PRNGKey(0)
    kx, kp, kn = jax.random.split(key, 3)

    D, N_pos, N_neg = 32, 8, 8
    x = jax.random.normal(kx, (D,), dtype=jnp.float32)
    X_feas_pos = jax.random.normal(kp, (N_pos, D), dtype=jnp.float32)
    X_feas_neg = jax.random.normal(kn, (N_neg, D), dtype=jnp.float32)
    epsilon_op, epsilon_pe, sigma = 0.5, 0.8, 0.7

    result, denom, numer = jax.block_until_ready(
        rbr_loss_forward(x, X_feas_pos, X_feas_neg,
                         epsilon_op=epsilon_op, epsilon_pe=epsilon_pe,
                         sigma=sigma))

    denom_ref = _reference_likelihood(x, X_feas_pos, mode="pe",
                                      sigma=sigma, eps=epsilon_pe)
    numer_ref = _reference_likelihood(x, X_feas_neg, mode="op",
                                      sigma=sigma, eps=epsilon_op)
    np.testing.assert_allclose(np.asarray(denom), np.asarray(denom_ref),
                               rtol=1e-2, atol=1e-2)
    np.testing.assert_allclose(np.asarray(numer), np.asarray(numer_ref),
                               rtol=1e-2, atol=1e-2)
    assert np.isfinite(np.asarray(result))
    print("KERNEL_OK")
</pallas_src>

<mosaic_0001>
module attributes {stable_mosaic.version = 11 : i64} {
  func.func @_rbr_kernel(%arg0: i32, %arg1: memref<1x128xf32, #tpu.memory_space<vmem>>, %arg2: memref<1x1xf32, #tpu.memory_space<vmem>>, %arg3: memref<1x1xf32, #tpu.memory_space<vmem>>, %arg4: memref<1x128xf32, #tpu.memory_space<vmem>>, %arg5: memref<1x128xf32, #tpu.memory_space<vmem>>, %arg6: memref<1x128xf32, #tpu.memory_space<vmem>>, %arg7: memref<1x128xf32, #tpu.memory_space<vmem>>, %arg8: memref<1x1xf32, #tpu.memory_space<vmem>>, %arg9: memref<1x1xf32, #tpu.memory_space<vmem>>, %arg10: memref<1x1xi32, #tpu.memory_space<vmem>>, %arg11: memref<1x1xi32, #tpu.memory_space<vmem>>, %arg12: memref<1x1xi32, #tpu.memory_space<vmem>>, %arg13: memref<1x1xi32, #tpu.memory_space<vmem>>) attributes {dimension_semantics = [#tpu.dimension_semantics<arbitrary>], iteration_bounds = array<i64: 1>, scalar_prefetch = 0 : i64, scratch_operands = 10 : i64, tpu.core_type = #tpu.core_type<tc>, window_params = [{pipeline_mode = #tpu.pipeline_mode<synchronous>, transform_indices = @transform_0, window_bounds = array<i64: 1, 128>}, {pipeline_mode = #tpu.pipeline_mode<synchronous>, transform_indices = @transform_1, window_bounds = array<i64: 1, 1>}, {pipeline_mode = #tpu.pipeline_mode<synchronous>, transform_indices = @transform_2, window_bounds = array<i64: 1, 1>}]} {
    %0 = tpu.iota {dimensions = array<i32: 1>} : vector<1x128xi32>
    %c8_i32 = arith.constant 8 : i32
    %1 = vector.broadcast %c8_i32 : i32 to vector<1x128xi32>
    %2 = arith.cmpi slt, %0, %1 : vector<1x128xi32>
    %c8_i32_0 = arith.constant 8 : i32
    %3 = vector.broadcast %c8_i32_0 : i32 to vector<1x128xi32>
    %4 = arith.cmpi sge, %0, %3 : vector<1x128xi32>
    %c16_i32 = arith.constant 16 : i32
    %5 = vector.broadcast %c16_i32 : i32 to vector<1x128xi32>
    %6 = arith.cmpi slt, %0, %5 : vector<1x128xi32>
    %7 = arith.andi %4, %6 : vector<1x128xi1>
    %cst = arith.constant 5.65685415 : f32
    %cst_1 = arith.constant -1.000000e+00 : f32
    %8 = vector.broadcast %cst : f32 to vector<1x128xf32>
    %9 = vector.broadcast %cst_1 : f32 to vector<1x128xf32>
    %10 = arith.select %2, %8, %9 : vector<1x128xi1>, vector<1x128xf32>
    %cst_2 = arith.constant -1.000000e+00 : f32
    %cst_3 = arith.constant 1.000000e+00 : f32
    %11 = vector.broadcast %cst_2 : f32 to vector<1x128xf32>
    %12 = vector.broadcast %cst_3 : f32 to vector<1x128xf32>
    %13 = arith.select %2, %11, %12 : vector<1x128xi1>, vector<1x128xf32>
    %cst_4 = arith.constant 0.141421363 : f32
    %cst_5 = arith.constant 5.000000e-01 : f32
    %14 = vector.broadcast %cst_4 : f32 to vector<1x128xf32>
    %15 = vector.broadcast %cst_5 : f32 to vector<1x128xf32>
    %16 = arith.select %2, %14, %15 : vector<1x128xi1>, vector<1x128xf32>
    %c0 = arith.constant 0 : index
    %c0_6 = arith.constant 0 : index
    %17 = vector.load %arg1[%c0, %c0_6] : memref<1x128xf32, #tpu.memory_space<vmem>>, vector<1x128xf32>
    %cst_7 = arith.constant 0.000000e+00 : f32
    %18 = vector.broadcast %cst_7 : f32 to vector<1x128xf32>
    %c0_8 = arith.constant 0 : index
    %c0_9 = arith.constant 0 : index
    %19 = vector.load %arg4[%c0_8, %c0_9] : memref<1x128xf32, #tpu.memory_space<vmem>>, vector<1x128xf32>
    tpu.vector_store %arg4[%c0_8, %c0_9], %18 {strides = array<i32>} : memref<1x128xf32, #tpu.memory_space<vmem>>, vector<1x128xf32>,
    %c0_10 = arith.constant 0 : index
    %c0_11 = arith.constant 0 : index
    %20 = vector.load %arg5[%c0_10, %c0_11] : memref<1x128xf32, #tpu.memory_space<vmem>>, vector<1x128xf32>
    tpu.vector_store %arg5[%c0_10, %c0_11], %18 {strides = array<i32>} : memref<1x128xf32, #tpu.memory_space<vmem>>, vector<1x128xf32>,
    %c0_12 = arith.constant 0 : index
    %c0_13 = arith.constant 0 : index
    %21 = vector.load %arg6[%c0_12, %c0_13] : memref<1x128xf32, #tpu.memory_space<vmem>>, vector<1x128xf32>
    tpu.vector_store %arg6[%c0_12, %c0_13], %18 {strides = array<i32>} : memref<1x128xf32, #tpu.memory_space<vmem>>, vector<1x128xf32>,
    %c0_14 = arith.constant 0 : index
    %c0_15 = arith.constant 0 : index
    %22 = vector.load %arg7[%c0_14, %c0_15] : memref<1x128xf32, #tpu.memory_space<vmem>>, vector<1x128xf32>
    tpu.vector_store %arg7[%c0_14, %c0_15], %18 {strides = array<i32>} : memref<1x128xf32, #tpu.memory_space<vmem>>, vector<1x128xf32>,
    %cst_16 = arith.constant 0x7F800000 : f32
    %23 = vector.broadcast %cst_16 : f32 to vector<1x1xf32>
    %c0_17 = arith.constant 0 : index
    %c0_18 = arith.constant 0 : index
    %24 = vector.load %arg8[%c0_17, %c0_18] : memref<1x1xf32, #tpu.memory_space<vmem>>, vector<1x1xf32>
    tpu.vector_store %arg8[%c0_17, %c0_18], %23 {strides = array<i32>} : memref<1x1xf32, #tpu.memory_space<vmem>>, vector<1x1xf32>,
    %c0_19 = arith.constant 0 : index
    %c0_20 = arith.constant 0 : index
    %25 = vector.load %arg9[%c0_19, %c0_20] : memref<1x1xf32, #tpu.memory_space<vmem>>, vector<1x1xf32>
    tpu.vector_store %arg9[%c0_19, %c0_20], %23 {strides = array<i32>} : memref<1x1xf32, #tpu.memory_space<vmem>>, vector<1x1xf32>,
    %c0_i32 = arith.constant 0 : i32
    %26 = vector.broadcast %c0_i32 : i32 to vector<1x1xi32>
    %c0_21 = arith.constant 0 : index
    %c0_22 = arith.constant 0 : index
    %27 = vector.load %arg10[%c0_21, %c0_22] : memref<1x1xi32, #tpu.memory_space<vmem>>, vector<1x1xi32>
    tpu.vector_store %arg10[%c0_21, %c0_22], %26 {strides = array<i32>} : memref<1x1xi32, #tpu.memory_space<vmem>>, vector<1x1xi32>,
    %c0_23 = arith.constant 0 : index
    %c0_24 = arith.constant 0 : index
    %28 = vector.load %arg11[%c0_23, %c0_24] : memref<1x1xi32, #tpu.memory_space<vmem>>, vector<1x1xi32>
    tpu.vector_store %arg11[%c0_23, %c0_24], %26 {strides = array<i32>} : memref<1x1xi32, #tpu.memory_space<vmem>>, vector<1x1xi32>,
    %c0_25 = arith.constant 0 : index
    %c0_26 = arith.constant 0 : index
    %29 = vector.load %arg12[%c0_25, %c0_26] : memref<1x1xi32, #tpu.memory_space<vmem>>, vector<1x1xi32>
    tpu.vector_store %arg12[%c0_25, %c0_26], %26 {strides = array<i32>} : memref<1x1xi32, #tpu.memory_space<vmem>>, vector<1x1xi32>,
    %c0_27 = arith.constant 0 : index
    %c0_28 = arith.constant 0 : index
    %30 = vector.load %arg13[%c0_27, %c0_28] : memref<1x1xi32, #tpu.memory_space<vmem>>, vector<1x1xi32>
    tpu.vector_store %arg13[%c0_27, %c0_28], %26 {strides = array<i32>} : memref<1x1xi32, #tpu.memory_space<vmem>>, vector<1x1xi32>,
    %c0_i32_29 = arith.constant 0 : i32
    %c50_i32 = arith.constant 50 : i32
    %31 = arith.addi %c0_i32_29, %c50_i32 : i32
    %c1_i32 = arith.constant 1 : i32
    scf.for %arg14 = %c0_i32_29 to %31 step %c1_i32  : i32 {
      %c0_64 = arith.constant 0 : index
      %c0_65 = arith.constant 0 : index
      %107 = vector.load %arg12[%c0_64, %c0_65] : memref<1x1xi32, #tpu.memory_space<vmem>>, vector<1x1xi32>
      %108 = vector.extract %107[0, 0] : i32 from vector<1x1xi32>
      %c0_i32_66 = arith.constant 0 : i32
      %109 = arith.cmpi sgt, %108, %c0_i32_66 : i32
      %c0_67 = arith.constant 0 : index
      %c0_68 = arith.constant 0 : index
      %110 = vector.load %arg13[%c0_67, %c0_68] : memref<1x1xi32, #tpu.memory_space<vmem>>, vector<1x1xi32>
      %111 = vector.extract %110[0, 0] : i32 from vector<1x1xi32>
      %c0_i32_69 = arith.constant 0 : i32
      %112 = arith.cmpi sgt, %111, %c0_i32_69 : i32
      %113 = arith.andi %109, %112 : i1
      %true = arith.constant true
      %114 = arith.xori %113, %true : i1
      %115 = arith.extui %114 : i1 to i32
      %c0_i32_70 = arith.constant 0 : i32
      %116 = arith.cmpi ne, %115, %c0_i32_70 : i32
      scf.if %116 {
        %c0_71 = arith.constant 0 : index
        %c0_72 = arith.constant 0 : index
        %117 = vector.load %arg4[%c0_71, %c0_72] : memref<1x128xf32, #tpu.memory_space<vmem>>, vector<1x128xf32>
        %c0_73 = arith.constant 0 : index
        %c0_74 = arith.constant 0 : index
        %118 = vector.load %arg5[%c0_73, %c0_74] : memref<1x128xf32, #tpu.memory_space<vmem>>, vector<1x128xf32>
        %c0_75 = arith.constant 0 : index
        %c0_76 = arith.constant 0 : index
        %119 = vector.load %arg6[%c0_75, %c0_76] : memref<1x128xf32, #tpu.memory_space<vmem>>, vector<1x128xf32>
        %c0_77 = arith.constant 0 : index
        %c0_78 = arith.constant 0 : index
        %120 = vector.load %arg7[%c0_77, %c0_78] : memref<1x128xf32, #tpu.memory_space<vmem>>, vector<1x128xf32>
        %c0_79 = arith.constant 0 : index
        %c0_80 = arith.constant 0 : index
        %121 = vector.load %arg8[%c0_79, %c0_80] : memref<1x1xf32, #tpu.memory_space<vmem>>, vector<1x1xf32>
        %c0_81 = arith.constant 0 : index
        %c0_82 = arith.constant 0 : index
        %122 = vector.load %arg9[%c0_81, %c0_82] : memref<1x1xf32, #tpu.memory_space<vmem>>, vector<1x1xf32>
        %c0_83 = arith.constant 0 : index
        %c0_84 = arith.constant 0 : index
        %123 = vector.load %arg10[%c0_83, %c0_84] : memref<1x1xi32, #tpu.memory_space<vmem>>, vector<1x1xi32>
        %c0_85 = arith.constant 0 : index
        %c0_86 = arith.constant 0 : index
        %124 = vector.load %arg11[%c0_85, %c0_86] : memref<1x1xi32, #tpu.memory_space<vmem>>, vector<1x1xi32>
        %c0_87 = arith.constant 0 : index
        %c0_88 = arith.constant 0 : index
        %125 = vector.load %arg12[%c0_87, %c0_88] : memref<1x1xi32, #tpu.memory_space<vmem>>, vector<1x1xi32>
        %c0_89 = arith.constant 0 : index
        %c0_90 = arith.constant 0 : index
        %126 = vector.load %arg13[%c0_89, %c0_90] : memref<1x1xi32, #tpu.memory_space<vmem>>, vector<1x1xi32>
        %c0_i32_91 = arith.constant 0 : i32
        %c4_i32 = arith.constant 4 : i32
        %127 = arith.addi %c0_i32_91, %c4_i32 : i32
        %c1_i32_92 = arith.constant 1 : i32
        %128:10 = scf.for %arg15 = %c0_i32_91 to %127 step %c1_i32_92 iter_args(%arg16 = %117, %arg17 = %118, %arg18 = %119, %arg19 = %120, %arg20 = %121, %arg21 = %122, %arg22 = %123, %arg23 = %124, %arg24 = %125, %arg25 = %126) -> (vector<1x128xf32>, vector<1x128xf32>, vector<1x128xf32>, vector<1x128xf32>, vector<1x1xf32>, vector<1x1xf32>, vector<1x1xi32>, vector<1x1xi32>, vector<1x1xi32>, vector<1x1xi32>)  : i32 {
          %cst_113 = arith.constant 0.699999988 : f32
          %139 = vector.broadcast %cst_113 : f32 to vector<1x128xf32>
          %140 = arith.addf %arg17, %139 : vector<1x128xf32>
          %141 = tpu.reciprocal %140 {approx = true} : vector<1x128xf32> -> vector<1x128xf32>
          %142 = arith.mulf %141, %141 : vector<1x128xf32>
          %143 = arith.mulf %10, %arg16 : vector<1x128xf32>
          %144 = arith.addf %17, %143 : vector<1x128xf32>
          %145 = arith.mulf %144, %144 : vector<1x128xf32>
          %cst_114 = arith.constant 3.200000e+01 : f32
          %146 = vector.broadcast %cst_114 : f32 to vector<1x128xf32>
          %147 = arith.mulf %146, %arg16 : vector<1x128xf32>
          %148 = arith.mulf %147, %arg16 : vector<1x128xf32>
          %cst_115 = arith.constant 0.640000998 : f32
          %149 = vector.broadcast %cst_115 : f32 to vector<1x128xf32>
          %150 = arith.subf %149, %148 : vector<1x128xf32>
          %151 = arith.mulf %arg17, %arg17 : vector<1x128xf32>
          %152 = arith.subf %150, %151 : vector<1x128xf32>
          %cst_116 = arith.constant 0.000000e+00 : f32
          %153 = vector.broadcast %cst_116 : f32 to vector<1x128xf32>
          %154 = arith.maximumf %152, %153 : vector<1x128xf32>
          %cst_117 = arith.constant 0.0322580636 : f32
          %155 = vector.broadcast %cst_117 : f32 to vector<1x128xf32>
          %156 = arith.mulf %154, %155 : vector<1x128xf32>
          %157 = math.sqrt %156 : vector<1x128xf32>
          %cst_118 = arith.constant 0.699999988 : f32
          %158 = vector.broadcast %cst_118 : f32 to vector<1x128xf32>
          %159 = arith.addf %157, %158 : vector<1x128xf32>
          %160 = arith.mulf %157, %159 : vector<1x128xf32>
          %161 = tpu.reciprocal %160 {approx = true} : vector<1x128xf32> -> vector<1x128xf32>
          %162 = math.log %140 : vector<1x128xf32>
          %cst_119 = arith.constant 5.000000e-01 : f32
          %163 = vector.broadcast %cst_119 : f32 to vector<1x128xf32>
          %164 = arith.mulf %163, %145 : vector<1x128xf32>
          %165 = arith.mulf %164, %142 : vector<1x128xf32>
          %166 = arith.addf %162, %165 : vector<1x128xf32>
          %167 = arith.mulf %13, %166 : vector<1x128xf32>
          %168 = math.log %159 : vector<1x128xf32>
          %cst_120 = arith.constant -3.100000e+01 : f32
          %169 = vector.broadcast %cst_120 : f32 to vector<1x128xf32>
          %170 = arith.mulf %169, %168 : vector<1x128xf32>
          %cst_121 = arith.constant -11.0569229 : f32
          %171 = vector.broadcast %cst_121 : f32 to vector<1x128xf32>
          %172 = arith.select %2, %170, %171 : vector<1x128xi1>, vector<1x128xf32>
          %173 = arith.addf %167, %172 : vector<1x128xf32>
          %174 = arith.mulf %13, %10 : vector<1x128xf32>
          %175 = arith.mulf %174, %144 : vector<1x128xf32>
          %176 = arith.mulf %175, %142 : vector<1x128xf32>
          %cst_122 = arith.constant -3.200000e+01 : f32
          %177 = vector.broadcast %cst_122 : f32 to vector<1x128xf32>
          %178 = arith.mulf %177, %arg16 : vector<1x128xf32>
          %179 = arith.mulf %178, %161 : vector<1x128xf32>
          %cst_123 = arith.constant 0.000000e+00 : f32
          %180 = vector.broadcast %cst_123 : f32 to vector<1x128xf32>
          %181 = arith.select %2, %179, %180 : vector<1x128xi1>, vector<1x128xf32>
          %182 = arith.addf %176, %181 : vector<1x128xf32>
          %183 = arith.mulf %145, %142 : vector<1x128xf32>
          %184 = arith.mulf %183, %141 : vector<1x128xf32>
          %185 = arith.subf %141, %184 : vector<1x128xf32>
          %186 = arith.mulf %13, %185 : vector<1x128xf32>
          %187 = arith.mulf %arg17, %161 : vector<1x128xf32>
          %cst_124 = arith.constant 0.000000e+00 : f32
          %188 = vector.broadcast %cst_124 : f32 to vector<1x128xf32>
          %189 = arith.select %2, %187, %188 : vector<1x128xi1>, vector<1x128xf32>
          %190 = arith.addf %186, %189 : vector<1x128xf32>
          %cst_125 = arith.constant 0.0316227749 : f32
          %191 = vector.broadcast %cst_125 : f32 to vector<1x128xf32>
          %192 = arith.mulf %191, %182 : vector<1x128xf32>
          %193 = arith.subf %arg16, %192 : vector<1x128xf32>
          %cst_126 = arith.constant 0.000000e+00 : f32
          %194 = vector.broadcast %cst_126 : f32 to vector<1x128xf32>
          %195 = arith.maximumf %193, %194 : vector<1x128xf32>
          %cst_127 = arith.constant 0.0316227749 : f32
          %196 = vector.broadcast %cst_127 : f32 to vector<1x128xf32>
          %197 = arith.mulf %196, %190 : vector<1x128xf32>
          %198 = arith.subf %arg17, %197 : vector<1x128xf32>
          %cst_128 = arith.constant 0.000000e+00 : f32
          %199 = vector.broadcast %cst_128 : f32 to vector<1x128xf32>
          %200 = arith.maximumf %198, %199 : vector<1x128xf32>
          %201 = arith.mulf %195, %195 : vector<1x128xf32>
          %202 = arith.mulf %200, %200 : vector<1x128xf32>
          %203 = arith.addf %201, %202 : vector<1x128xf32>
          %204 = math.rsqrt %203 : vector<1x128xf32>
          %205 = arith.mulf %16, %204 : vector<1x128xf32>
          %cst_129 = arith.constant 1.000000e+00 : f32
          %206 = vector.broadcast %cst_129 : f32 to vector<1x128xf32>
          %207 = arith.minimumf %206, %205 : vector<1x128xf32>
          %208 = arith.mulf %195, %207 : vector<1x128xf32>
          %209 = arith.mulf %200, %207 : vector<1x128xf32>
          %210 = vector.shape_cast %arg24 : vector<1x1xi32> to vector<1x1xi32>
          %211 = vector.broadcast %210 : vector<1x1xi32> to vector<1x128xi32>
          %212 = vector.shape_cast %arg25 : vector<1x1xi32> to vector<1x1xi32>
          %213 = vector.broadcast %212 : vector<1x1xi32> to vector<1x128xi32>
          %214 = arith.select %2, %211, %213 : vector<1x128xi1>, vector<1x128xi32>
          %c0_i32_130 = arith.constant 0 : i32
          %215 = vector.broadcast %c0_i32_130 : i32 to vector<1x128xi32>
          %216 = arith.cmpi sgt, %214, %215 : vector<1x128xi32>
          %217 = arith.select %216, %arg18, %208 : vector<1x128xi1>, vector<1x128xf32>
          %218 = arith.select %216, %arg19, %209 : vector<1x128xi1>, vector<1x128xf32>
          %cst_131 = arith.constant 0.000000e+00 : f32
          %219 = vector.broadcast %cst_131 : f32 to vector<1x128xf32>
          %220 = arith.select %2, %173, %219 : vector<1x128xi1>, vector<1x128xf32>
          %cst_132 = arith.constant dense<0.000000e+00> : vector<1xf32>
          %221 = vector.multi_reduction <add>, %220, %cst_132 [1] : vector<1x128xf32> to vector<1xf32>
          %222 = vector.shape_cast %221 : vector<1xf32> to vector<1x1xf32>
          %cst_133 = arith.constant 0.000000e+00 : f32
          %223 = vector.broadcast %cst_133 : f32 to vector<1x128xf32>
          %224 = arith.select %7, %173, %223 : vector<1x128xi1>, vector<1x128xf32>
          %cst_134 = arith.constant dense<0.000000e+00> : vector<1xf32>
          %225 = vector.multi_reduction <add>, %224, %cst_134 [1] : vector<1x128xf32> to vector<1xf32>
          %226 = vector.shape_cast %225 : vector<1xf32> to vector<1x1xf32>
          %227 = arith.subf %arg20, %222 : vector<1x1xf32>
          %cst_135 = arith.constant 1.000000e-10 : f32
          %228 = vector.broadcast %cst_135 : f32 to vector<1x1xf32>
          %229 = arith.cmpf ole, %227, %228 : vector<1x1xf32>
          %c1_i32_136 = arith.constant 1 : i32
          %230 = vector.broadcast %c1_i32_136 : i32 to vector<1x1xi32>
          %231 = arith.addi %arg22, %230 : vector<1x1xi32>
          %c0_i32_137 = arith.constant 0 : i32
          %232 = vector.broadcast %c0_i32_137 : i32 to vector<1x1xi32>
          %233 = arith.select %229, %231, %232 : vector<1x1xi1>, vector<1x1xi32>
          %c10_i32 = arith.constant 10 : i32
          %234 = vector.broadcast %c10_i32 : i32 to vector<1x1xi32>
          %235 = arith.cmpi sge, %233, %234 : vector<1x1xi32>
          %236 = arith.minimumf %arg20, %222 : vector<1x1xf32>
          %237 = arith.select %235, %arg20, %236 : vector<1x1xi1>, vector<1x1xf32>
          %c0_i32_138 = arith.constant 0 : i32
          %238 = vector.broadcast %c0_i32_138 : i32 to vector<1x1xi32>
          %239 = arith.cmpi eq, %arg24, %238 : vector<1x1xi32>
          %240 = arith.select %239, %237, %arg20 : vector<1x1xi1>, vector<1x1xf32>
          %241 = arith.select %239, %233, %arg22 : vector<1x1xi1>, vector<1x1xi32>
          %242 = arith.extui %235 : vector<1x1xi1> to vector<1x1xi32>
          %243 = arith.select %239, %242, %arg24 : vector<1x1xi1>, vector<1x1xi32>
          %244 = arith.subf %arg21, %226 : vector<1x1xf32>
          %cst_139 = arith.constant 1.000000e-10 : f32
          %245 = vector.broadcast %cst_139 : f32 to vector<1x1xf32>
          %246 = arith.cmpf ole, %244, %245 : vector<1x1xf32>
          %c1_i32_140 = arith.constant 1 : i32
          %247 = vector.broadcast %c1_i32_140 : i32 to vector<1x1xi32>
          %248 = arith.addi %arg23, %247 : vector<1x1xi32>
          %c0_i32_141 = arith.constant 0 : i32
          %249 = vector.broadcast %c0_i32_141 : i32 to vector<1x1xi32>
          %250 = arith.select %246, %248, %249 : vector<1x1xi1>, vector<1x1xi32>
          %c10_i32_142 = arith.constant 10 : i32
          %251 = vector.broadcast %c10_i32_142 : i32 to vector<1x1xi32>
          %252 = arith.cmpi sge, %250, %251 : vector<1x1xi32>
          %253 = arith.minimumf %arg21, %226 : vector<1x1xf32>
          %254 = arith.select %252, %arg21, %253 : vector<1x1xi1>, vector<1x1xf32>
          %c0_i32_143 = arith.constant 0 : i32
          %255 = vector.broadcast %c0_i32_143 : i32 to vector<1x1xi32>
          %256 = arith.cmpi eq, %arg25, %255 : vector<1x1xi32>
          %257 = arith.select %256, %254, %arg21 : vector<1x1xi1>, vector<1x1xf32>
          %258 = arith.select %256, %250, %arg23 : vector<1x1xi1>, vector<1x1xi32>
          %259 = arith.extui %252 : vector<1x1xi1> to vector<1x1xi32>
          %260 = arith.select %256, %259, %arg25 : vector<1x1xi1>, vector<1x1xi32>
          %cst_144 = arith.constant 0.699999988 : f32
          %261 = vector.broadcast %cst_144 : f32 to vector<1x128xf32>
          %262 = arith.addf %209, %261 : vector<1x128xf32>
          %263 = tpu.reciprocal %262 {approx = true} : vector<1x128xf32> -> vector<1x128xf32>
          %264 = arith.mulf %263, %263 : vector<1x128xf32>
          %265 = arith.mulf %10, %208 : vector<1x128xf32>
          %266 = arith.addf %17, %265 : vector<1x128xf32>
          %267 = arith.mulf %266, %266 : vector<1x128xf32>
          %cst_145 = arith.constant 3.200000e+01 : f32
          %268 = vector.broadcast %cst_145 : f32 to vector<1x128xf32>
          %269 = arith.mulf %268, %208 : vector<1x128xf32>
          %270 = arith.mulf %269, %208 : vector<1x128xf32>
          %cst_146 = arith.constant 0.640000998 : f32
          %271 = vector.broadcast %cst_146 : f32 to vector<1x128xf32>
          %272 = arith.subf %271, %270 : vector<1x128xf32>
          %273 = arith.mulf %209, %209 : vector<1x128xf32>
          %274 = arith.subf %272, %273 : vector<1x128xf32>
          %cst_147 = arith.constant 0.000000e+00 : f32
          %275 = vector.broadcast %cst_147 : f32 to vector<1x128xf32>
          %276 = arith.maximumf %274, %275 : vector<1x128xf32>
          %cst_148 = arith.constant 0.0322580636 : f32
          %277 = vector.broadcast %cst_148 : f32 to vector<1x128xf32>
          %278 = arith.mulf %276, %277 : vector<1x128xf32>
          %279 = math.sqrt %278 : vector<1x128xf32>
          %cst_149 = arith.constant 0.699999988 : f32
          %280 = vector.broadcast %cst_149 : f32 to vector<1x128xf32>
          %281 = arith.addf %279, %280 : vector<1x128xf32>
          %282 = arith.mulf %279, %281 : vector<1x128xf32>
          %283 = tpu.reciprocal %282 {approx = true} : vector<1x128xf32> -> vector<1x128xf32>
          %284 = math.log %262 : vector<1x128xf32>
          %cst_150 = arith.constant 5.000000e-01 : f32
          %285 = vector.broadcast %cst_150 : f32 to vector<1x128xf32>
          %286 = arith.mulf %285, %267 : vector<1x128xf32>
          %287 = arith.mulf %286, %264 : vector<1x128xf32>
          %288 = arith.addf %284, %287 : vector<1x128xf32>
          %289 = arith.mulf %13, %288 : vector<1x128xf32>
          %290 = math.log %281 : vector<1x128xf32>
          %cst_151 = arith.constant -3.100000e+01 : f32
          %291 = vector.broadcast %cst_151 : f32 to vector<1x128xf32>
          %292 = arith.mulf %291, %290 : vector<1x128xf32>
          %cst_152 = arith.constant -11.0569229 : f32
          %293 = vector.broadcast %cst_152 : f32 to vector<1x128xf32>
          %294 = arith.select %2, %292, %293 : vector<1x128xi1>, vector<1x128xf32>
          %295 = arith.addf %289, %294 : vector<1x128xf32>
          %296 = arith.mulf %13, %10 : vector<1x128xf32>
          %297 = arith.mulf %296, %266 : vector<1x128xf32>
          %298 = arith.mulf %297, %264 : vector<1x128xf32>
          %cst_153 = arith.constant -3.200000e+01 : f32
          %299 = vector.broadcast %cst_153 : f32 to vector<1x128xf32>
          %300 = arith.mulf %299, %208 : vector<1x128xf32>
          %301 = arith.mulf %300, %283 : vector<1x128xf32>
          %cst_154 = arith.constant 0.000000e+00 : f32
          %302 = vector.broadcast %cst_154 : f32 to vector<1x128xf32>
          %303 = arith.select %2, %301, %302 : vector<1x128xi1>, vector<1x128xf32>
          %304 = arith.addf %298, %303 : vector<1x128xf32>
          %305 = arith.mulf %267, %264 : vector<1x128xf32>
          %306 = arith.mulf %305, %263 : vector<1x128xf32>
          %307 = arith.subf %263, %306 : vector<1x128xf32>
          %308 = arith.mulf %13, %307 : vector<1x128xf32>
          %309 = arith.mulf %209, %283 : vector<1x128xf32>
          %cst_155 = arith.constant 0.000000e+00 : f32
          %310 = vector.broadcast %cst_155 : f32 to vector<1x128xf32>
          %311 = arith.select %2, %309, %310 : vector<1x128xi1>, vector<1x128xf32>
          %312 = arith.addf %308, %311 : vector<1x128xf32>
          %cst_156 = arith.constant 0.0316227749 : f32
          %313 = vector.broadcast %cst_156 : f32 to vector<1x128xf32>
          %314 = arith.mulf %313, %304 : vector<1x128xf32>
          %315 = arith.subf %208, %314 : vector<1x128xf32>
          %cst_157 = arith.constant 0.000000e+00 : f32
          %316 = vector.broadcast %cst_157 : f32 to vector<1x128xf32>
          %317 = arith.maximumf %315, %316 : vector<1x128xf32>
          %cst_158 = arith.constant 0.0316227749 : f32
          %318 = vector.broadcast %cst_158 : f32 to vector<1x128xf32>
          %319 = arith.mulf %318, %312 : vector<1x128xf32>
          %320 = arith.subf %209, %319 : vector<1x128xf32>
          %cst_159 = arith.constant 0.000000e+00 : f32
          %321 = vector.broadcast %cst_159 : f32 to vector<1x128xf32>
          %322 = arith.maximumf %320, %321 : vector<1x128xf32>
          %323 = arith.mulf %317, %317 : vector<1x128xf32>
          %324 = arith.mulf %322, %322 : vector<1x128xf32>
          %325 = arith.addf %323, %324 : vector<1x128xf32>
          %326 = math.rsqrt %325 : vector<1x128xf32>
          %327 = arith.mulf %16, %326 : vector<1x128xf32>
          %cst_160 = arith.constant 1.000000e+00 : f32
          %328 = vector.broadcast %cst_160 : f32 to vector<1x128xf32>
          %329 = arith.minimumf %328, %327 : vector<1x128xf32>
          %330 = arith.mulf %317, %329 : vector<1x128xf32>
          %331 = arith.mulf %322, %329 : vector<1x128xf32>
          %332 = vector.shape_cast %243 : vector<1x1xi32> to vector<1x1xi32>
          %333 = vector.broadcast %332 : vector<1x1xi32> to vector<1x128xi32>
          %334 = vector.shape_cast %260 : vector<1x1xi32> to vector<1x1xi32>
          %335 = vector.broadcast %334 : vector<1x1xi32> to vector<1x128xi32>
          %336 = arith.select %2, %333, %335 : vector<1x128xi1>, vector<1x128xi32>
          %c0_i32_161 = arith.constant 0 : i32
          %337 = vector.broadcast %c0_i32_161 : i32 to vector<1x128xi32>
          %338 = arith.cmpi sgt, %336, %337 : vector<1x128xi32>
          %339 = arith.select %338, %217, %330 : vector<1x128xi1>, vector<1x128xf32>
          %340 = arith.select %338, %218, %331 : vector<1x128xi1>, vector<1x128xf32>
          %cst_162 = arith.constant 0.000000e+00 : f32
          %341 = vector.broadcast %cst_162 : f32 to vector<1x128xf32>
          %342 = arith.select %2, %295, %341 : vector<1x128xi1>, vector<1x128xf32>
          %cst_163 = arith.constant dense<0.000000e+00> : vector<1xf32>
          %343 = vector.multi_reduction <add>, %342, %cst_163 [1] : vector<1x128xf32> to vector<1xf32>
          %344 = vector.shape_cast %343 : vector<1xf32> to vector<1x1xf32>
          %cst_164 = arith.constant 0.000000e+00 : f32
          %345 = vector.broadcast %cst_164 : f32 to vector<1x128xf32>
          %346 = arith.select %7, %295, %345 : vector<1x128xi1>, vector<1x128xf32>
          %cst_165 = arith.constant dense<0.000000e+00> : vector<1xf32>
          %347 = vector.multi_reduction <add>, %346, %cst_165 [1] : vector<1x128xf32> to vector<1xf32>
          %348 = vector.shape_cast %347 : vector<1xf32> to vector<1x1xf32>
          %349 = arith.subf %240, %344 : vector<1x1xf32>
          %cst_166 = arith.constant 1.000000e-10 : f32
          %350 = vector.broadcast %cst_166 : f32 to vector<1x1xf32>
          %351 = arith.cmpf ole, %349, %350 : vector<1x1xf32>
          %c1_i32_167 = arith.constant 1 : i32
          %352 = vector.broadcast %c1_i32_167 : i32 to vector<1x1xi32>
          %353 = arith.addi %241, %352 : vector<1x1xi32>
          %c0_i32_168 = arith.constant 0 : i32
          %354 = vector.broadcast %c0_i32_168 : i32 to vector<1x1xi32>
          %355 = arith.select %351, %353, %354 : vector<1x1xi1>, vector<1x1xi32>
          %c10_i32_169 = arith.constant 10 : i32
          %356 = vector.broadcast %c10_i32_169 : i32 to vector<1x1xi32>
          %357 = arith.cmpi sge, %355, %356 : vector<1x1xi32>
          %358 = arith.minimumf %240, %344 : vector<1x1xf32>
          %359 = arith.select %357, %240, %358 : vector<1x1xi1>, vector<1x1xf32>
          %c0_i32_170 = arith.constant 0 : i32
          %360 = vector.broadcast %c0_i32_170 : i32 to vector<1x1xi32>
          %361 = arith.cmpi eq, %243, %360 : vector<1x1xi32>
          %362 = arith.select %361, %359, %240 : vector<1x1xi1>, vector<1x1xf32>
          %363 = arith.select %361, %355, %241 : vector<1x1xi1>, vector<1x1xi32>
          %364 = arith.extui %357 : vector<1x1xi1> to vector<1x1xi32>
          %365 = arith.select %361, %364, %243 : vector<1x1xi1>, vector<1x1xi32>
          %366 = arith.subf %257, %348 : vector<1x1xf32>
          %cst_171 = arith.constant 1.000000e-10 : f32
          %367 = vector.broadcast %cst_171 : f32 to vector<1x1xf32>
          %368 = arith.cmpf ole, %366, %367 : vector<1x1xf32>
          %c1_i32_172 = arith.constant 1 : i32
          %369 = vector.broadcast %c1_i32_172 : i32 to vector<1x1xi32>
          %370 = arith.addi %258, %369 : vector<1x1xi32>
          %c0_i32_173 = arith.constant 0 : i32
          %371 = vector.broadcast %c0_i32_173 : i32 to vector<1x1xi32>
          %372 = arith.select %368, %370, %371 : vector<1x1xi1>, vector<1x1xi32>
          %c10_i32_174 = arith.constant 10 : i32
          %373 = vector.broadcast %c10_i32_174 : i32 to vector<1x1xi32>
          %374 = arith.cmpi sge, %372, %373 : vector<1x1xi32>
          %375 = arith.minimumf %257, %348 : vector<1x1xf32>
          %376 = arith.select %374, %257, %375 : vector<1x1xi1>, vector<1x1xf32>
          %c0_i32_175 = arith.constant 0 : i32
          %377 = vector.broadcast %c0_i32_175 : i32 to vector<1x1xi32>
          %378 = arith.cmpi eq, %260, %377 : vector<1x1xi32>
          %379 = arith.select %378, %376, %257 : vector<1x1xi1>, vector<1x1xf32>
          %380 = arith.select %378, %372, %258 : vector<1x1xi1>, vector<1x1xi32>
          %381 = arith.extui %374 : vector<1x1xi1> to vector<1x1xi32>
          %382 = arith.select %378, %381, %260 : vector<1x1xi1>, vector<1x1xi32>
          %cst_176 = arith.constant 0.699999988 : f32
          %383 = vector.broadcast %cst_176 : f32 to vector<1x128xf32>
          %384 = arith.addf %331, %383 : vector<1x128xf32>
          %385 = tpu.reciprocal %384 {approx = true} : vector<1x128xf32> -> vector<1x128xf32>
          %386 = arith.mulf %385, %385 : vector<1x128xf32>
          %387 = arith.mulf %10, %330 : vector<1x128xf32>
          %388 = arith.addf %17, %387 : vector<1x128xf32>
          %389 = arith.mulf %388, %388 : vector<1x128xf32>
          %cst_177 = arith.constant 3.200000e+01 : f32
          %390 = vector.broadcast %cst_177 : f32 to vector<1x128xf32>
          %391 = arith.mulf %390, %330 : vector<1x128xf32>
          %392 = arith.mulf %391, %330 : vector<1x128xf32>
          %cst_178 = arith.constant 0.640000998 : f32
          %393 = vector.broadcast %cst_178 : f32 to vector<1x128xf32>
          %394 = arith.subf %393, %392 : vector<1x128xf32>
          %395 = arith.mulf %331, %331 : vector<1x128xf32>
          %396 = arith.subf %394, %395 : vector<1x128xf32>
          %cst_179 = arith.constant 0.000000e+00 : f32
          %397 = vector.broadcast %cst_179 : f32 to vector<1x128xf32>
          %398 = arith.maximumf %396, %397 : vector<1x128xf32>
          %cst_180 = arith.constant 0.0322580636 : f32
          %399 = vector.broadcast %cst_180 : f32 to vector<1x128xf32>
          %400 = arith.mulf %398, %399 : vector<1x128xf32>
          %401 = math.sqrt %400 : vector<1x128xf32>
          %cst_181 = arith.constant 0.699999988 : f32
          %402 = vector.broadcast %cst_181 : f32 to vector<1x128xf32>
          %403 = arith.addf %401, %402 : vector<1x128xf32>
          %404 = arith.mulf %401, %403 : vector<1x128xf32>
          %405 = tpu.reciprocal %404 {approx = true} : vector<1x128xf32> -> vector<1x128xf32>
          %406 = math.log %384 : vector<1x128xf32>
          %cst_182 = arith.constant 5.000000e-01 : f32
          %407 = vector.broadcast %cst_182 : f32 to vector<1x128xf32>
          %408 = arith.mulf %407, %389 : vector<1x128xf32>
          %409 = arith.mulf %408, %386 : vector<1x128xf32>
          %410 = arith.addf %406, %409 : vector<1x128xf32>
          %411 = arith.mulf %13, %410 : vector<1x128xf32>
          %412 = math.log %403 : vector<1x128xf32>
          %cst_183 = arith.constant -3.100000e+01 : f32
          %413 = vector.broadcast %cst_183 : f32 to vector<1x128xf32>
          %414 = arith.mulf %413, %412 : vector<1x128xf32>
          %cst_184 = arith.constant -11.0569229 : f32
          %415 = vector.broadcast %cst_184 : f32 to vector<1x128xf32>
          %416 = arith.select %2, %414, %415 : vector<1x128xi1>, vector<1x128xf32>
          %417 = arith.addf %411, %416 : vector<1x128xf32>
          %418 = arith.mulf %13, %10 : vector<1x128xf32>
          %419 = arith.mulf %418, %388 : vector<1x128xf32>
          %420 = arith.mulf %419, %386 : vector<1x128xf32>
          %cst_185 = arith.constant -3.200000e+01 : f32
          %421 = vector.broadcast %cst_185 : f32 to vector<1x128xf32>
          %422 = arith.mulf %421, %330 : vector<1x128xf32>
          %423 = arith.mulf %422, %405 : vector<1x128xf32>
          %cst_186 = arith.constant 0.000000e+00 : f32
          %424 = vector.broadcast %cst_186 : f32 to vector<1x128xf32>
          %425 = arith.select %2, %423, %424 : vector<1x128xi1>, vector<1x128xf32>
          %426 = arith.addf %420, %425 : vector<1x128xf32>
          %427 = arith.mulf %389, %386 : vector<1x128xf32>
          %428 = arith.mulf %427, %385 : vector<1x128xf32>
          %429 = arith.subf %385, %428 : vector<1x128xf32>
          %430 = arith.mulf %13, %429 : vector<1x128xf32>
          %431 = arith.mulf %331, %405 : vector<1x128xf32>
          %cst_187 = arith.constant 0.000000e+00 : f32
          %432 = vector.broadcast %cst_187 : f32 to vector<1x128xf32>
          %433 = arith.select %2, %431, %432 : vector<1x128xi1>, vector<1x128xf32>
          %434 = arith.addf %430, %433 : vector<1x128xf32>
          %cst_188 = arith.constant 0.0316227749 : f32
          %435 = vector.broadcast %cst_188 : f32 to vector<1x128xf32>
          %436 = arith.mulf %435, %426 : vector<1x128xf32>
          %437 = arith.subf %330, %436 : vector<1x128xf32>
          %cst_189 = arith.constant 0.000000e+00 : f32
          %438 = vector.broadcast %cst_189 : f32 to vector<1x128xf32>
          %439 = arith.maximumf %437, %438 : vector<1x128xf32>
          %cst_190 = arith.constant 0.0316227749 : f32
          %440 = vector.broadcast %cst_190 : f32 to vector<1x128xf32>
          %441 = arith.mulf %440, %434 : vector<1x128xf32>
          %442 = arith.subf %331, %441 : vector<1x128xf32>
          %cst_191 = arith.constant 0.000000e+00 : f32
          %443 = vector.broadcast %cst_191 : f32 to vector<1x128xf32>
          %444 = arith.maximumf %442, %443 : vector<1x128xf32>
          %445 = arith.mulf %439, %439 : vector<1x128xf32>
          %446 = arith.mulf %444, %444 : vector<1x128xf32>
          %447 = arith.addf %445, %446 : vector<1x128xf32>
          %448 = math.rsqrt %447 : vector<1x128xf32>
          %449 = arith.mulf %16, %448 : vector<1x128xf32>
          %cst_192 = arith.constant 1.000000e+00 : f32
          %450 = vector.broadcast %cst_192 : f32 to vector<1x128xf32>
          %451 = arith.minimumf %450, %449 : vector<1x128xf32>
          %452 = arith.mulf %439, %451 : vector<1x128xf32>
          %453 = arith.mulf %444, %451 : vector<1x128xf32>
          %454 = vector.shape_cast %365 : vector<1x1xi32> to vector<1x1xi32>
          %455 = vector.broadcast %454 : vector<1x1xi32> to vector<1x128xi32>
          %456 = vector.shape_cast %382 : vector<1x1xi32> to vector<1x1xi32>
          %457 = vector.broadcast %456 : vector<1x1xi32> to vector<1x128xi32>
          %458 = arith.select %2, %455, %457 : vector<1x128xi1>, vector<1x128xi32>
          %c0_i32_193 = arith.constant 0 : i32
          %459 = vector.broadcast %c0_i32_193 : i32 to vector<1x128xi32>
          %460 = arith.cmpi sgt, %458, %459 : vector<1x128xi32>
          %461 = arith.select %460, %339, %452 : vector<1x128xi1>, vector<1x128xf32>
          %462 = arith.select %460, %340, %453 : vector<1x128xi1>, vector<1x128xf32>
          %cst_194 = arith.constant 0.000000e+00 : f32
          %463 = vector.broadcast %cst_194 : f32 to vector<1x128xf32>
          %464 = arith.select %2, %417, %463 : vector<1x128xi1>, vector<1x128xf32>
          %cst_195 = arith.constant dense<0.000000e+00> : vector<1xf32>
          %465 = vector.multi_reduction <add>, %464, %cst_195 [1] : vector<1x128xf32> to vector<1xf32>
          %466 = vector.shape_cast %465 : vector<1xf32> to vector<1x1xf32>
          %cst_196 = arith.constant 0.000000e+00 : f32
          %467 = vector.broadcast %cst_196 : f32 to vector<1x128xf32>
          %468 = arith.select %7, %417, %467 : vector<1x128xi1>, vector<1x128xf32>
          %cst_197 = arith.constant dense<0.000000e+00> : vector<1xf32>
          %469 = vector.multi_reduction <add>, %468, %cst_197 [1] : vector<1x128xf32> to vector<1xf32>
          %470 = vector.shape_cast %469 : vector<1xf32> to vector<1x1xf32>
          %471 = arith.subf %362, %466 : vector<1x1xf32>
          %cst_198 = arith.constant 1.000000e-10 : f32
          %472 = vector.broadcast %cst_198 : f32 to vector<1x1xf32>
          %473 = arith.cmpf ole, %471, %472 : vector<1x1xf32>
          %c1_i32_199 = arith.constant 1 : i32
          %474 = vector.broadcast %c1_i32_199 : i32 to vector<1x1xi32>
          %475 = arith.addi %363, %474 : vector<1x1xi32>
          %c0_i32_200 = arith.constant 0 : i32
          %476 = vector.broadcast %c0_i32_200 : i32 to vector<1x1xi32>
          %477 = arith.select %473, %475, %476 : vector<1x1xi1>, vector<1x1xi32>
          %c10_i32_201 = arith.constant 10 : i32
          %478 = vector.broadcast %c10_i32_201 : i32 to vector<1x1xi32>
          %479 = arith.cmpi sge, %477, %478 : vector<1x1xi32>
          %480 = arith.minimumf %362, %466 : vector<1x1xf32>
          %481 = arith.select %479, %362, %480 : vector<1x1xi1>, vector<1x1xf32>
          %c0_i32_202 = arith.constant 0 : i32
          %482 = vector.broadcast %c0_i32_202 : i32 to vector<1x1xi32>
          %483 = arith.cmpi eq, %365, %482 : vector<1x1xi32>
          %484 = arith.select %483, %481, %362 : vector<1x1xi1>, vector<1x1xf32>
          %485 = arith.select %483, %477, %363 : vector<1x1xi1>, vector<1x1xi32>
          %486 = arith.extui %479 : vector<1x1xi1> to vector<1x1xi32>
          %487 = arith.select %483, %486, %365 : vector<1x1xi1>, vector<1x1xi32>
          %488 = arith.subf %379, %470 : vector<1x1xf32>
          %cst_203 = arith.constant 1.000000e-10 : f32
          %489 = vector.broadcast %cst_203 : f32 to vector<1x1xf32>
          %490 = arith.cmpf ole, %488, %489 : vector<1x1xf32>
          %c1_i32_204 = arith.constant 1 : i32
          %491 = vector.broadcast %c1_i32_204 : i32 to vector<1x1xi32>
          %492 = arith.addi %380, %491 : vector<1x1xi32>
          %c0_i32_205 = arith.constant 0 : i32
          %493 = vector.broadcast %c0_i32_205 : i32 to vector<1x1xi32>
          %494 = arith.select %490, %492, %493 : vector<1x1xi1>, vector<1x1xi32>
          %c10_i32_206 = arith.constant 10 : i32
          %495 = vector.broadcast %c10_i32_206 : i32 to vector<1x1xi32>
          %496 = arith.cmpi sge, %494, %495 : vector<1x1xi32>
          %497 = arith.minimumf %379, %470 : vector<1x1xf32>
          %498 = arith.select %496, %379, %497 : vector<1x1xi1>, vector<1x1xf32>
          %c0_i32_207 = arith.constant 0 : i32
          %499 = vector.broadcast %c0_i32_207 : i32 to vector<1x1xi32>
          %500 = arith.cmpi eq, %382, %499 : vector<1x1xi32>
          %501 = arith.select %500, %498, %379 : vector<1x1xi1>, vector<1x1xf32>
          %502 = arith.select %500, %494, %380 : vector<1x1xi1>, vector<1x1xi32>
          %503 = arith.extui %496 : vector<1x1xi1> to vector<1x1xi32>
          %504 = arith.select %500, %503, %382 : vector<1x1xi1>, vector<1x1xi32>
          %cst_208 = arith.constant 0.699999988 : f32
          %505 = vector.broadcast %cst_208 : f32 to vector<1x128xf32>
          %506 = arith.addf %453, %505 : vector<1x128xf32>
          %507 = tpu.reciprocal %506 {approx = true} : vector<1x128xf32> -> vector<1x128xf32>
          %508 = arith.mulf %507, %507 : vector<1x128xf32>
          %509 = arith.mulf %10, %452 : vector<1x128xf32>
          %510 = arith.addf %17, %509 : vector<1x128xf32>
          %511 = arith.mulf %510, %510 : vector<1x128xf32>
          %cst_209 = arith.constant 3.200000e+01 : f32
          %512 = vector.broadcast %cst_209 : f32 to vector<1x128xf32>
          %513 = arith.mulf %512, %452 : vector<1x128xf32>
          %514 = arith.mulf %513, %452 : vector<1x128xf32>
          %cst_210 = arith.constant 0.640000998 : f32
          %515 = vector.broadcast %cst_210 : f32 to vector<1x128xf32>
          %516 = arith.subf %515, %514 : vector<1x128xf32>
          %517 = arith.mulf %453, %453 : vector<1x128xf32>
          %518 = arith.subf %516, %517 : vector<1x128xf32>
          %cst_211 = arith.constant 0.000000e+00 : f32
          %519 = vector.broadcast %cst_211 : f32 to vector<1x128xf32>
          %520 = arith.maximumf %518, %519 : vector<1x128xf32>
          %cst_212 = arith.constant 0.0322580636 : f32
          %521 = vector.broadcast %cst_212 : f32 to vector<1x128xf32>
          %522 = arith.mulf %520, %521 : vector<1x128xf32>
          %523 = math.sqrt %522 : vector<1x128xf32>
          %cst_213 = arith.constant 0.699999988 : f32
          %524 = vector.broadcast %cst_213 : f32 to vector<1x128xf32>
          %525 = arith.addf %523, %524 : vector<1x128xf32>
          %526 = arith.mulf %523, %525 : vector<1x128xf32>
          %527 = tpu.reciprocal %526 {approx = true} : vector<1x128xf32> -> vector<1x128xf32>
          %528 = math.log %506 : vector<1x128xf32>
          %cst_214 = arith.constant 5.000000e-01 : f32
          %529 = vector.broadcast %cst_214 : f32 to vector<1x128xf32>
          %530 = arith.mulf %529, %511 : vector<1x128xf32>
          %531 = arith.mulf %530, %508 : vector<1x128xf32>
          %532 = arith.addf %528, %531 : vector<1x128xf32>
          %533 = arith.mulf %13, %532 : vector<1x128xf32>
          %534 = math.log %525 : vector<1x128xf32>
          %cst_215 = arith.constant -3.100000e+01 : f32
          %535 = vector.broadcast %cst_215 : f32 to vector<1x128xf32>
          %536 = arith.mulf %535, %534 : vector<1x128xf32>
          %cst_216 = arith.constant -11.0569229 : f32
          %537 = vector.broadcast %cst_216 : f32 to vector<1x128xf32>
          %538 = arith.select %2, %536, %537 : vector<1x128xi1>, vector<1x128xf32>
          %539 = arith.addf %533, %538 : vector<1x128xf32>
          %540 = arith.mulf %13, %10 : vector<1x128xf32>
          %541 = arith.mulf %540, %510 : vector<1x128xf32>
          %542 = arith.mulf %541, %508 : vector<1x128xf32>
          %cst_217 = arith.constant -3.200000e+01 : f32
          %543 = vector.broadcast %cst_217 : f32 to vector<1x128xf32>
          %544 = arith.mulf %543, %452 : vector<1x128xf32>
          %545 = arith.mulf %544, %527 : vector<1x128xf32>
          %cst_218 = arith.constant 0.000000e+00 : f32
          %546 = vector.broadcast %cst_218 : f32 to vector<1x128xf32>
          %547 = arith.select %2, %545, %546 : vector<1x128xi1>, vector<1x128xf32>
          %548 = arith.addf %542, %547 : vector<1x128xf32>
          %549 = arith.mulf %511, %508 : vector<1x128xf32>
          %550 = arith.mulf %549, %507 : vector<1x128xf32>
          %551 = arith.subf %507, %550 : vector<1x128xf32>
          %552 = arith.mulf %13, %551 : vector<1x128xf32>
          %553 = arith.mulf %453, %527 : vector<1x128xf32>
          %cst_219 = arith.constant 0.000000e+00 : f32
          %554 = vector.broadcast %cst_219 : f32 to vector<1x128xf32>
          %555 = arith.select %2, %553, %554 : vector<1x128xi1>, vector<1x128xf32>
          %556 = arith.addf %552, %555 : vector<1x128xf32>
          %cst_220 = arith.constant 0.0316227749 : f32
          %557 = vector.broadcast %cst_220 : f32 to vector<1x128xf32>
          %558 = arith.mulf %557, %548 : vector<1x128xf32>
          %559 = arith.subf %452, %558 : vector<1x128xf32>
          %cst_221 = arith.constant 0.000000e+00 : f32
          %560 = vector.broadcast %cst_221 : f32 to vector<1x128xf32>
          %561 = arith.maximumf %559, %560 : vector<1x128xf32>
          %cst_222 = arith.constant 0.0316227749 : f32
          %562 = vector.broadcast %cst_222 : f32 to vector<1x128xf32>
          %563 = arith.mulf %562, %556 : vector<1x128xf32>
          %564 = arith.subf %453, %563 : vector<1x128xf32>
          %cst_223 = arith.constant 0.000000e+00 : f32
          %565 = vector.broadcast %cst_223 : f32 to vector<1x128xf32>
          %566 = arith.maximumf %564, %565 : vector<1x128xf32>
          %567 = arith.mulf %561, %561 : vector<1x128xf32>
          %568 = arith.mulf %566, %566 : vector<1x128xf32>
          %569 = arith.addf %567, %568 : vector<1x128xf32>
          %570 = math.rsqrt %569 : vector<1x128xf32>
          %571 = arith.mulf %16, %570 : vector<1x128xf32>
          %cst_224 = arith.constant 1.000000e+00 : f32
          %572 = vector.broadcast %cst_224 : f32 to vector<1x128xf32>
          %573 = arith.minimumf %572, %571 : vector<1x128xf32>
          %574 = arith.mulf %561, %573 : vector<1x128xf32>
          %575 = arith.mulf %566, %573 : vector<1x128xf32>
          %576 = vector.shape_cast %487 : vector<1x1xi32> to vector<1x1xi32>
          %577 = vector.broadcast %576 : vector<1x1xi32> to vector<1x128xi32>
          %578 = vector.shape_cast %504 : vector<1x1xi32> to vector<1x1xi32>
          %579 = vector.broadcast %578 : vector<1x1xi32> to vector<1x128xi32>
          %580 = arith.select %2, %577, %579 : vector<1x128xi1>, vector<1x128xi32>
          %c0_i32_225 = arith.constant 0 : i32
          %581 = vector.broadcast %c0_i32_225 : i32 to vector<1x128xi32>
          %582 = arith.cmpi sgt, %580, %581 : vector<1x128xi32>
          %583 = arith.select %582, %461, %574 : vector<1x128xi1>, vector<1x128xf32>
          %584 = arith.select %582, %462, %575 : vector<1x128xi1>, vector<1x128xf32>
          %cst_226 = arith.constant 0.000000e+00 : f32
          %585 = vector.broadcast %cst_226 : f32 to vector<1x128xf32>
          %586 = arith.select %2, %539, %585 : vector<1x128xi1>, vector<1x128xf32>
          %cst_227 = arith.constant dense<0.000000e+00> : vector<1xf32>
          %587 = vector.multi_reduction <add>, %586, %cst_227 [1] : vector<1x128xf32> to vector<1xf32>
          %588 = vector.shape_cast %587 : vector<1xf32> to vector<1x1xf32>
          %cst_228 = arith.constant 0.000000e+00 : f32
          %589 = vector.broadcast %cst_228 : f32 to vector<1x128xf32>
          %590 = arith.select %7, %539, %589 : vector<1x128xi1>, vector<1x128xf32>
          %cst_229 = arith.constant dense<0.000000e+00> : vector<1xf32>
          %591 = vector.multi_reduction <add>, %590, %cst_229 [1] : vector<1x128xf32> to vector<1xf32>
          %592 = vector.shape_cast %591 : vector<1xf32> to vector<1x1xf32>
          %593 = arith.subf %484, %588 : vector<1x1xf32>
          %cst_230 = arith.constant 1.000000e-10 : f32
          %594 = vector.broadcast %cst_230 : f32 to vector<1x1xf32>
          %595 = arith.cmpf ole, %593, %594 : vector<1x1xf32>
          %c1_i32_231 = arith.constant 1 : i32
          %596 = vector.broadcast %c1_i32_231 : i32 to vector<1x1xi32>
          %597 = arith.addi %485, %596 : vector<1x1xi32>
          %c0_i32_232 = arith.constant 0 : i32
          %598 = vector.broadcast %c0_i32_232 : i32 to vector<1x1xi32>
          %599 = arith.select %595, %597, %598 : vector<1x1xi1>, vector<1x1xi32>
          %c10_i32_233 = arith.constant 10 : i32
          %600 = vector.broadcast %c10_i32_233 : i32 to vector<1x1xi32>
          %601 = arith.cmpi sge, %599, %600 : vector<1x1xi32>
          %602 = arith.minimumf %484, %588 : vector<1x1xf32>
          %603 = arith.select %601, %484, %602 : vector<1x1xi1>, vector<1x1xf32>
          %c0_i32_234 = arith.constant 0 : i32
          %604 = vector.broadcast %c0_i32_234 : i32 to vector<1x1xi32>
          %605 = arith.cmpi eq, %487, %604 : vector<1x1xi32>
          %606 = arith.select %605, %603, %484 : vector<1x1xi1>, vector<1x1xf32>
          %607 = arith.select %605, %599, %485 : vector<1x1xi1>, vector<1x1xi32>
          %608 = arith.extui %601 : vector<1x1xi1> to vector<1x1xi32>
          %609 = arith.select %605, %608, %487 : vector<1x1xi1>, vector<1x1xi32>
          %610 = arith.subf %501, %592 : vector<1x1xf32>
          %cst_235 = arith.constant 1.000000e-10 : f32
          %611 = vector.broadcast %cst_235 : f32 to vector<1x1xf32>
          %612 = arith.cmpf ole, %610, %611 : vector<1x1xf32>
          %c1_i32_236 = arith.constant 1 : i32
          %613 = vector.broadcast %c1_i32_236 : i32 to vector<1x1xi32>
          %614 = arith.addi %502, %613 : vector<1x1xi32>
          %c0_i32_237 = arith.constant 0 : i32
          %615 = vector.broadcast %c0_i32_237 : i32 to vector<1x1xi32>
          %616 = arith.select %612, %614, %615 : vector<1x1xi1>, vector<1x1xi32>
          %c10_i32_238 = arith.constant 10 : i32
          %617 = vector.broadcast %c10_i32_238 : i32 to vector<1x1xi32>
          %618 = arith.cmpi sge, %616, %617 : vector<1x1xi32>
          %619 = arith.minimumf %501, %592 : vector<1x1xf32>
          %620 = arith.select %618, %501, %619 : vector<1x1xi1>, vector<1x1xf32>
          %c0_i32_239 = arith.constant 0 : i32
          %621 = vector.broadcast %c0_i32_239 : i32 to vector<1x1xi32>
          %622 = arith.cmpi eq, %504, %621 : vector<1x1xi32>
          %623 = arith.select %622, %620, %501 : vector<1x1xi1>, vector<1x1xf32>
          %624 = arith.select %622, %616, %502 : vector<1x1xi1>, vector<1x1xi32>
          %625 = arith.extui %618 : vector<1x1xi1> to vector<1x1xi32>
          %626 = arith.select %622, %625, %504 : vector<1x1xi1>, vector<1x1xi32>
          %cst_240 = arith.constant 0.699999988 : f32
          %627 = vector.broadcast %cst_240 : f32 to vector<1x128xf32>
          %628 = arith.addf %575, %627 : vector<1x128xf32>
          %629 = tpu.reciprocal %628 {approx = true} : vector<1x128xf32> -> vector<1x128xf32>
          %630 = arith.mulf %629, %629 : vector<1x128xf32>
          %631 = arith.mulf %10, %574 : vector<1x128xf32>
          %632 = arith.addf %17, %631 : vector<1x128xf32>
          %633 = arith.mulf %632, %632 : vector<1x128xf32>
          %cst_241 = arith.constant 3.200000e+01 : f32
          %634 = vector.broadcast %cst_241 : f32 to vector<1x128xf32>
          %635 = arith.mulf %634, %574 : vector<1x128xf32>
          %636 = arith.mulf %635, %574 : vector<1x128xf32>
          %cst_242 = arith.constant 0.640000998 : f32
          %637 = vector.broadcast %cst_242 : f32 to vector<1x128xf32>
          %638 = arith.subf %637, %636 : vector<1x128xf32>
          %639 = arith.mulf %575, %575 : vector<1x128xf32>
          %640 = arith.subf %638, %639 : vector<1x128xf32>
          %cst_243 = arith.constant 0.000000e+00 : f32
          %641 = vector.broadcast %cst_243 : f32 to vector<1x128xf32>
          %642 = arith.maximumf %640, %641 : vector<1x128xf32>
          %cst_244 = arith.constant 0.0322580636 : f32
          %643 = vector.broadcast %cst_244 : f32 to vector<1x128xf32>
          %644 = arith.mulf %642, %643 : vector<1x128xf32>
          %645 = math.sqrt %644 : vector<1x128xf32>
          %cst_245 = arith.constant 0.699999988 : f32
          %646 = vector.broadcast %cst_245 : f32 to vector<1x128xf32>
          %647 = arith.addf %645, %646 : vector<1x128xf32>
          %648 = arith.mulf %645, %647 : vector<1x128xf32>
          %649 = tpu.reciprocal %648 {approx = true} : vector<1x128xf32> -> vector<1x128xf32>
          %650 = math.log %628 : vector<1x128xf32>
          %cst_246 = arith.constant 5.000000e-01 : f32
          %651 = vector.broadcast %cst_246 : f32 to vector<1x128xf32>
          %652 = arith.mulf %651, %633 : vector<1x128xf32>
          %653 = arith.mulf %652, %630 : vector<1x128xf32>
          %654 = arith.addf %650, %653 : vector<1x128xf32>
          %655 = arith.mulf %13, %654 : vector<1x128xf32>
          %656 = math.log %647 : vector<1x128xf32>
          %cst_247 = arith.constant -3.100000e+01 : f32
          %657 = vector.broadcast %cst_247 : f32 to vector<1x128xf32>
          %658 = arith.mulf %657, %656 : vector<1x128xf32>
          %cst_248 = arith.constant -11.0569229 : f32
          %659 = vector.broadcast %cst_248 : f32 to vector<1x128xf32>
          %660 = arith.select %2, %658, %659 : vector<1x128xi1>, vector<1x128xf32>
          %661 = arith.addf %655, %660 : vector<1x128xf32>
          %662 = arith.mulf %13, %10 : vector<1x128xf32>
          %663 = arith.mulf %662, %632 : vector<1x128xf32>
          %664 = arith.mulf %663, %630 : vector<1x128xf32>
          %cst_249 = arith.constant -3.200000e+01 : f32
          %665 = vector.broadcast %cst_249 : f32 to vector<1x128xf32>
          %666 = arith.mulf %665, %574 : vector<1x128xf32>
          %667 = arith.mulf %666, %649 : vector<1x128xf32>
          %cst_250 = arith.constant 0.000000e+00 : f32
          %668 = vector.broadcast %cst_250 : f32 to vector<1x128xf32>
          %669 = arith.select %2, %667, %668 : vector<1x128xi1>, vector<1x128xf32>
          %670 = arith.addf %664, %669 : vector<1x128xf32>
          %671 = arith.mulf %633, %630 : vector<1x128xf32>
          %672 = arith.mulf %671, %629 : vector<1x128xf32>
          %673 = arith.subf %629, %672 : vector<1x128xf32>
          %674 = arith.mulf %13, %673 : vector<1x128xf32>
          %675 = arith.mulf %575, %649 : vector<1x128xf32>
          %cst_251 = arith.constant 0.000000e+00 : f32
          %676 = vector.broadcast %cst_251 : f32 to vector<1x128xf32>
          %677 = arith.select %2, %675, %676 : vector<1x128xi1>, vector<1x128xf32>
          %678 = arith.addf %674, %677 : vector<1x128xf32>
          %cst_252 = arith.constant 0.0316227749 : f32
          %679 = vector.broadcast %cst_252 : f32 to vector<1x128xf32>
          %680 = arith.mulf %679, %670 : vector<1x128xf32>
          %681 = arith.subf %574, %680 : vector<1x128xf32>
          %cst_253 = arith.constant 0.000000e+00 : f32
          %682 = vector.broadcast %cst_253 : f32 to vector<1x128xf32>
          %683 = arith.maximumf %681, %682 : vector<1x128xf32>
          %cst_254 = arith.constant 0.0316227749 : f32
          %684 = vector.broadcast %cst_254 : f32 to vector<1x128xf32>
          %685 = arith.mulf %684, %678 : vector<1x128xf32>
          %686 = arith.subf %575, %685 : vector<1x128xf32>
          %cst_255 = arith.constant 0.000000e+00 : f32
          %687 = vector.broadcast %cst_255 : f32 to vector<1x128xf32>
          %688 = arith.maximumf %686, %687 : vector<1x128xf32>
          %689 = arith.mulf %683, %683 : vector<1x128xf32>
          %690 = arith.mulf %688, %688 : vector<1x128xf32>
          %691 = arith.addf %689, %690 : vector<1x128xf32>
          %692 = math.rsqrt %691 : vector<1x128xf32>
          %693 = arith.mulf %16, %692 : vector<1x128xf32>
          %cst_256 = arith.constant 1.000000e+00 : f32
          %694 = vector.broadcast %cst_256 : f32 to vector<1x128xf32>
          %695 = arith.minimumf %694, %693 : vector<1x128xf32>
          %696 = arith.mulf %683, %695 : vector<1x128xf32>
          %697 = arith.mulf %688, %695 : vector<1x128xf32>
          %698 = vector.shape_cast %609 : vector<1x1xi32> to vector<1x1xi32>
          %699 = vector.broadcast %698 : vector<1x1xi32> to vector<1x128xi32>
          %700 = vector.shape_cast %626 : vector<1x1xi32> to vector<1x1xi32>
          %701 = vector.broadcast %700 : vector<1x1xi32> to vector<1x128xi32>
          %702 = arith.select %2, %699, %701 : vector<1x128xi1>, vector<1x128xi32>
          %c0_i32_257 = arith.constant 0 : i32
          %703 = vector.broadcast %c0_i32_257 : i32 to vector<1x128xi32>
          %704 = arith.cmpi sgt, %702, %703 : vector<1x128xi32>
          %705 = arith.select %704, %583, %696 : vector<1x128xi1>, vector<1x128xf32>
          %706 = arith.select %704, %584, %697 : vector<1x128xi1>, vector<1x128xf32>
          %cst_258 = arith.constant 0.000000e+00 : f32
          %707 = vector.broadcast %cst_258 : f32 to vector<1x128xf32>
          %708 = arith.select %2, %661, %707 : vector<1x128xi1>, vector<1x128xf32>
          %cst_259 = arith.constant dense<0.000000e+00> : vector<1xf32>
          %709 = vector.multi_reduction <add>, %708, %cst_259 [1] : vector<1x128xf32> to vector<1xf32>
          %710 = vector.shape_cast %709 : vector<1xf32> to vector<1x1xf32>
          %cst_260 = arith.constant 0.000000e+00 : f32
          %711 = vector.broadcast %cst_260 : f32 to vector<1x128xf32>
          %712 = arith.select %7, %661, %711 : vector<1x128xi1>, vector<1x128xf32>
          %cst_261 = arith.constant dense<0.000000e+00> : vector<1xf32>
          %713 = vector.multi_reduction <add>, %712, %cst_261 [1] : vector<1x128xf32> to vector<1xf32>
          %714 = vector.shape_cast %713 : vector<1xf32> to vector<1x1xf32>
          %715 = arith.subf %606, %710 : vector<1x1xf32>
          %cst_262 = arith.constant 1.000000e-10 : f32
          %716 = vector.broadcast %cst_262 : f32 to vector<1x1xf32>
          %717 = arith.cmpf ole, %715, %716 : vector<1x1xf32>
          %c1_i32_263 = arith.constant 1 : i32
          %718 = vector.broadcast %c1_i32_263 : i32 to vector<1x1xi32>
          %719 = arith.addi %607, %718 : vector<1x1xi32>
          %c0_i32_264 = arith.constant 0 : i32
          %720 = vector.broadcast %c0_i32_264 : i32 to vector<1x1xi32>
          %721 = arith.select %717, %719, %720 : vector<1x1xi1>, vector<1x1xi32>
          %c10_i32_265 = arith.constant 10 : i32
          %722 = vector.broadcast %c10_i32_265 : i32 to vector<1x1xi32>
          %723 = arith.cmpi sge, %721, %722 : vector<1x1xi32>
          %724 = arith.minimumf %606, %710 : vector<1x1xf32>
          %725 = arith.select %723, %606, %724 : vector<1x1xi1>, vector<1x1xf32>
          %c0_i32_266 = arith.constant 0 : i32
          %726 = vector.broadcast %c0_i32_266 : i32 to vector<1x1xi32>
          %727 = arith.cmpi eq, %609, %726 : vector<1x1xi32>
          %728 = arith.select %727, %725, %606 : vector<1x1xi1>, vector<1x1xf32>
          %729 = arith.select %727, %721, %607 : vector<1x1xi1>, vector<1x1xi32>
          %730 = arith.extui %723 : vector<1x1xi1> to vector<1x1xi32>
          %731 = arith.select %727, %730, %609 : vector<1x1xi1>, vector<1x1xi32>
          %732 = arith.subf %623, %714 : vector<1x1xf32>
          %cst_267 = arith.constant 1.000000e-10 : f32
          %733 = vector.broadcast %cst_267 : f32 to vector<1x1xf32>
          %734 = arith.cmpf ole, %732, %733 : vector<1x1xf32>
          %c1_i32_268 = arith.constant 1 : i32
          %735 = vector.broadcast %c1_i32_268 : i32 to vector<1x1xi32>
          %736 = arith.addi %624, %735 : vector<1x1xi32>
          %c0_i32_269 = arith.constant 0 : i32
          %737 = vector.broadcast %c0_i32_269 : i32 to vector<1x1xi32>
          %738 = arith.select %734, %736, %737 : vector<1x1xi1>, vector<1x1xi32>
          %c10_i32_270 = arith.constant 10 : i32
          %739 = vector.broadcast %c10_i32_270 : i32 to vector<1x1xi32>
          %740 = arith.cmpi sge, %738, %739 : vector<1x1xi32>
          %741 = arith.minimumf %623, %714 : vector<1x1xf32>
          %742 = arith.select %740, %623, %741 : vector<1x1xi1>, vector<1x1xf32>
          %c0_i32_271 = arith.constant 0 : i32
          %743 = vector.broadcast %c0_i32_271 : i32 to vector<1x1xi32>
          %744 = arith.cmpi eq, %626, %743 : vector<1x1xi32>
          %745 = arith.select %744, %742, %623 : vector<1x1xi1>, vector<1x1xf32>
          %746 = arith.select %744, %738, %624 : vector<1x1xi1>, vector<1x1xi32>
          %747 = arith.extui %740 : vector<1x1xi1> to vector<1x1xi32>
          %748 = arith.select %744, %747, %626 : vector<1x1xi1>, vector<1x1xi32>
          scf.yield %696, %697, %705, %706, %728, %745, %729, %746, %731, %748 : vector<1x128xf32>, vector<1x128xf32>, vector<1x128xf32>, vector<1x128xf32>, vector<1x1xf32>, vector<1x1xf32>, vector<1x1xi32>, vector<1x1xi32>, vector<1x1xi32>, vector<1x1xi32>
        }
        %c0_93 = arith.constant 0 : index
        %c0_94 = arith.constant 0 : index
        %129 = vector.load %arg4[%c0_93, %c0_94] : memref<1x128xf32, #tpu.memory_space<vmem>>, vector<1x128xf32>
        tpu.vector_store %arg4[%c0_93, %c0_94], %128#0 {strides = array<i32>} : memref<1x128xf32, #tpu.memory_space<vmem>>, vector<1x128xf32>,
        %c0_95 = arith.constant 0 : index
        %c0_96 = arith.constant 0 : index
        %130 = vector.load %arg5[%c0_95, %c0_96] : memref<1x128xf32, #tpu.memory_space<vmem>>, vector<1x128xf32>
        tpu.vector_store %arg5[%c0_95, %c0_96], %128#1 {strides = array<i32>} : memref<1x128xf32, #tpu.memory_space<vmem>>, vector<1x128xf32>,
        %c0_97 = arith.constant 0 : index
        %c0_98 = arith.constant 0 : index
        %131 = vector.load %arg6[%c0_97, %c0_98] : memref<1x128xf32, #tpu.memory_space<vmem>>, vector<1x128xf32>
        tpu.vector_store %arg6[%c0_97, %c0_98], %128#2 {strides = array<i32>} : memref<1x128xf32, #tpu.memory_space<vmem>>, vector<1x128xf32>,
        %c0_99 = arith.constant 0 : index
        %c0_100 = arith.constant 0 : index
        %132 = vector.load %arg7[%c0_99, %c0_100] : memref<1x128xf32, #tpu.memory_space<vmem>>, vector<1x128xf32>
        tpu.vector_store %arg7[%c0_99, %c0_100], %128#3 {strides = array<i32>} : memref<1x128xf32, #tpu.memory_space<vmem>>, vector<1x128xf32>,
        %c0_101 = arith.constant 0 : index
        %c0_102 = arith.constant 0 : index
        %133 = vector.load %arg8[%c0_101, %c0_102] : memref<1x1xf32, #tpu.memory_space<vmem>>, vector<1x1xf32>
        tpu.vector_store %arg8[%c0_101, %c0_102], %128#4 {strides = array<i32>} : memref<1x1xf32, #tpu.memory_space<vmem>>, vector<1x1xf32>,
        %c0_103 = arith.constant 0 : index
        %c0_104 = arith.constant 0 : index
        %134 = vector.load %arg9[%c0_103, %c0_104] : memref<1x1xf32, #tpu.memory_space<vmem>>, vector<1x1xf32>
        tpu.vector_store %arg9[%c0_103, %c0_104], %128#5 {strides = array<i32>} : memref<1x1xf32, #tpu.memory_space<vmem>>, vector<1x1xf32>,
        %c0_105 = arith.constant 0 : index
        %c0_106 = arith.constant 0 : index
        %135 = vector.load %arg10[%c0_105, %c0_106] : memref<1x1xi32, #tpu.memory_space<vmem>>, vector<1x1xi32>
        tpu.vector_store %arg10[%c0_105, %c0_106], %128#6 {strides = array<i32>} : memref<1x1xi32, #tpu.memory_space<vmem>>, vector<1x1xi32>,
        %c0_107 = arith.constant 0 : index
        %c0_108 = arith.constant 0 : index
        %136 = vector.load %arg11[%c0_107, %c0_108] : memref<1x1xi32, #tpu.memory_space<vmem>>, vector<1x1xi32>
        tpu.vector_store %arg11[%c0_107, %c0_108], %128#7 {strides = array<i32>} : memref<1x1xi32, #tpu.memory_space<vmem>>, vector<1x1xi32>,
        %c0_109 = arith.constant 0 : index
        %c0_110 = arith.constant 0 : index
        %137 = vector.load %arg12[%c0_109, %c0_110] : memref<1x1xi32, #tpu.memory_space<vmem>>, vector<1x1xi32>
        tpu.vector_store %arg12[%c0_109, %c0_110], %128#8 {strides = array<i32>} : memref<1x1xi32, #tpu.memory_space<vmem>>, vector<1x1xi32>,
        %c0_111 = arith.constant 0 : index
        %c0_112 = arith.constant 0 : index
        %138 = vector.load %arg13[%c0_111, %c0_112] : memref<1x1xi32, #tpu.memory_space<vmem>>, vector<1x1xi32>
        tpu.vector_store %arg13[%c0_111, %c0_112], %128#9 {strides = array<i32>} : memref<1x1xi32, #tpu.memory_space<vmem>>, vector<1x1xi32>,
      } else {
      }
    }
    %c0_30 = arith.constant 0 : index
    %c0_31 = arith.constant 0 : index
    %32 = vector.load %arg12[%c0_30, %c0_31] : memref<1x1xi32, #tpu.memory_space<vmem>>, vector<1x1xi32>
    %c0_32 = arith.constant 0 : index
    %c0_33 = arith.constant 0 : index
    %33 = vector.load %arg13[%c0_32, %c0_33] : memref<1x1xi32, #tpu.memory_space<vmem>>, vector<1x1xi32>
    %34 = vector.shape_cast %32 : vector<1x1xi32> to vector<1x1xi32>
    %35 = vector.broadcast %34 : vector<1x1xi32> to vector<1x128xi32>
    %36 = vector.shape_cast %33 : vector<1x1xi32> to vector<1x1xi32>
    %37 = vector.broadcast %36 : vector<1x1xi32> to vector<1x128xi32>
    %38 = arith.select %2, %35, %37 : vector<1x128xi1>, vector<1x128xi32>
    %c0_i32_34 = arith.constant 0 : i32
    %39 = vector.broadcast %c0_i32_34 : i32 to vector<1x128xi32>
    %40 = arith.cmpi sgt, %38, %39 : vector<1x128xi32>
    %c0_35 = arith.constant 0 : index
    %c0_36 = arith.constant 0 : index
    %41 = vector.load %arg6[%c0_35, %c0_36] : memref<1x128xf32, #tpu.memory_space<vmem>>, vector<1x128xf32>
    %c0_37 = arith.constant 0 : index
    %c0_38 = arith.constant 0 : index
    %42 = vector.load %arg4[%c0_37, %c0_38] : memref<1x128xf32, #tpu.memory_space<vmem>>, vector<1x128xf32>
    %43 = arith.select %40, %41, %42 : vector<1x128xi1>, vector<1x128xf32>
    %c0_39 = arith.constant 0 : index
    %c0_40 = arith.constant 0 : index
    %44 = vector.load %arg7[%c0_39, %c0_40] : memref<1x128xf32, #tpu.memory_space<vmem>>, vector<1x128xf32>
    %c0_41 = arith.constant 0 : index
    %c0_42 = arith.constant 0 : index
    %45 = vector.load %arg5[%c0_41, %c0_42] : memref<1x128xf32, #tpu.memory_space<vmem>>, vector<1x128xf32>
    %46 = arith.select %40, %44, %45 : vector<1x128xi1>, vector<1x128xf32>
    %cst_43 = arith.constant 0.699999988 : f32
    %47 = vector.broadcast %cst_43 : f32 to vector<1x128xf32>
    %48 = arith.addf %46, %47 : vector<1x128xf32>
    %cst_44 = arith.constant 1.000000e+00 : f32
    %49 = vector.broadcast %cst_44 : f32 to vector<1x128xf32>
    %50 = arith.divf %49, %48 : vector<1x128xf32>
    %51 = arith.mulf %50, %50 : vector<1x128xf32>
    %52 = arith.mulf %10, %43 : vector<1x128xf32>
    %53 = arith.addf %17, %52 : vector<1x128xf32>
    %54 = arith.mulf %53, %53 : vector<1x128xf32>
    %cst_45 = arith.constant 3.200000e+01 : f32
    %55 = vector.broadcast %cst_45 : f32 to vector<1x128xf32>
    %56 = arith.mulf %55, %43 : vector<1x128xf32>
    %57 = arith.mulf %56, %43 : vector<1x128xf32>
    %cst_46 = arith.constant 0.640000998 : f32
    %58 = vector.broadcast %cst_46 : f32 to vector<1x128xf32>
    %59 = arith.subf %58, %57 : vector<1x128xf32>
    %60 = arith.mulf %46, %46 : vector<1x128xf32>
    %61 = arith.subf %59, %60 : vector<1x128xf32>
    %cst_47 = arith.constant 0.000000e+00 : f32
    %62 = vector.broadcast %cst_47 : f32 to vector<1x128xf32>
    %63 = arith.maximumf %61, %62 : vector<1x128xf32>
    %cst_48 = arith.constant 0.0322580636 : f32
    %64 = vector.broadcast %cst_48 : f32 to vector<1x128xf32>
    %65 = arith.mulf %63, %64 : vector<1x128xf32>
    %66 = math.sqrt %65 : vector<1x128xf32>
    %cst_49 = arith.constant 0.699999988 : f32
    %67 = vector.broadcast %cst_49 : f32 to vector<1x128xf32>
    %68 = arith.addf %66, %67 : vector<1x128xf32>
    %69 = math.log %48 : vector<1x128xf32>
    %cst_50 = arith.constant 5.000000e-01 : f32
    %70 = vector.broadcast %cst_50 : f32 to vector<1x128xf32>
    %71 = arith.mulf %70, %54 : vector<1x128xf32>
    %72 = arith.mulf %71, %51 : vector<1x128xf32>
    %73 = arith.addf %69, %72 : vector<1x128xf32>
    %74 = arith.mulf %13, %73 : vector<1x128xf32>
    %75 = math.log %68 : vector<1x128xf32>
    %cst_51 = arith.constant -3.100000e+01 : f32
    %76 = vector.broadcast %cst_51 : f32 to vector<1x128xf32>
    %77 = arith.mulf %76, %75 : vector<1x128xf32>
    %cst_52 = arith.constant -11.0569229 : f32
    %78 = vector.broadcast %cst_52 : f32 to vector<1x128xf32>
    %79 = arith.select %2, %77, %78 : vector<1x128xi1>, vector<1x128xf32>
    %80 = arith.addf %74, %79 : vector<1x128xf32>
    %cst_53 = arith.constant 0xFF800000 : f32
    %81 = vector.broadcast %cst_53 : f32 to vector<1x128xf32>
    %82 = arith.select %2, %80, %81 : vector<1x128xi1>, vector<1x128xf32>
    %cst_54 = arith.constant dense<0xFF800000> : vector<1xf32>
    %83 = vector.multi_reduction <maximumf>, %82, %cst_54 [1] : vector<1x128xf32> to vector<1xf32>
    %84 = vector.shape_cast %83 : vector<1xf32> to vector<1x1xf32>
    %85 = vector.broadcast %84 : vector<1x1xf32> to vector<1x128xf32>
    %86 = arith.subf %82, %85 : vector<1x128xf32>
    %87 = math.exp %86 : vector<1x128xf32>
    %cst_55 = arith.constant dense<0.000000e+00> : vector<1xf32>
    %88 = vector.multi_reduction <add>, %87, %cst_55 [1] : vector<1x128xf32> to vector<1xf32>
    %89 = vector.shape_cast %88 : vector<1xf32> to vector<1x1xf32>
    %90 = math.log %89 : vector<1x1xf32>
    %91 = arith.addf %84, %90 : vector<1x1xf32>
    %c0_56 = arith.constant 0 : index
    %c0_57 = arith.constant 0 : index
    %92 = vector.load %arg2[%c0_56, %c0_57] : memref<1x1xf32, #tpu.memory_space<vmem>>, vector<1x1xf32>
    tpu.vector_store %arg2[%c0_56, %c0_57], %91 {strides = array<i32>} : memref<1x1xf32, #tpu.memory_space<vmem>>, vector<1x1xf32>,
    %cst_58 = arith.constant 0.000000e+00 : f32
    %93 = vector.broadcast %cst_58 : f32 to vector<1x128xf32>
    %94 = arith.subf %93, %80 : vector<1x128xf32>
    %cst_59 = arith.constant 0xFF800000 : f32
    %95 = vector.broadcast %cst_59 : f32 to vector<1x128xf32>
    %96 = arith.select %7, %94, %95 : vector<1x128xi1>, vector<1x128xf32>
    %cst_60 = arith.constant dense<0xFF800000> : vector<1xf32>
    %97 = vector.multi_reduction <maximumf>, %96, %cst_60 [1] : vector<1x128xf32> to vector<1xf32>
    %98 = vector.shape_cast %97 : vector<1xf32> to vector<1x1xf32>
    %99 = vector.broadcast %98 : vector<1x1xf32> to vector<1x128xf32>
    %100 = arith.subf %96, %99 : vector<1x128xf32>
    %101 = math.exp %100 : vector<1x128xf32>
    %cst_61 = arith.constant dense<0.000000e+00> : vector<1xf32>
    %102 = vector.multi_reduction <add>, %101, %cst_61 [1] : vector<1x128xf32> to vector<1xf32>
    %103 = vector.shape_cast %102 : vector<1xf32> to vector<1x1xf32>
    %104 = math.log %103 : vector<1x1xf32>
    %105 = arith.addf %98, %104 : vector<1x1xf32>
    %c0_62 = arith.constant 0 : index
    %c0_63 = arith.constant 0 : index
    %106 = vector.load %arg3[%c0_62, %c0_63] : memref<1x1xf32, #tpu.memory_space<vmem>>, vector<1x1xf32>
    tpu.vector_store %arg3[%c0_62, %c0_63], %105 {strides = array<i32>} : memref<1x1xf32, #tpu.memory_space<vmem>>, vector<1x1xf32>,
    return
  }
  func.func @transform_0(%arg0: i32) -> (i32, i32) {
    %c0_i32 = arith.constant 0 : i32
    %c0_i32_0 = arith.constant 0 : i32
    %c0_i32_1 = arith.constant 0 : i32
    return %c0_i32, %c0_i32_0 : i32, i32
  }
  func.func @transform_1(%arg0: i32) -> (i32, i32) {
    %c0_i32 = arith.constant 0 : i32
    %c0_i32_0 = arith.constant 0 : i32
    %c0_i32_1 = arith.constant 0 : i32
    return %c0_i32, %c0_i32_0 : i32, i32
  }
  func.func @transform_2(%arg0: i32) -> (i32, i32) {
    %c0_i32 = arith.constant 0 : i32
    %c0_i32_0 = arith.constant 0 : i32
    %c0_i32_1 = arith.constant 0 : i32
    return %c0_i32, %c0_i32_0 : i32, i32
  }
}

</mosaic_0001>

<llo_original>
// kernel: tpu_custom_call.1
$region0: #{tpu_custom_call.1}
  #allocation0 [shape = 'u32[]', space=smem, size = 0x4, offset = 0x4, fixed_abs, tag = 'smem constant byte address 0x4 - core index']
  #allocation1 [shape = 'u32[144,128]{1,0:T(1,128)}', space=vmem, size = 0x12000, scoped, tag = 'internal scratch']
  #allocation2 [shape = 'f32[1,128]{1,0:T(1,128)}', space=vmem, size = 0x200, scoped, tag = 'scratch operand']
  #allocation3 [shape = 'f32[1,128]{1,0:T(1,128)}', space=vmem, size = 0x200, scoped, tag = 'scratch operand']
  #allocation4 [shape = 'f32[1,128]{1,0:T(1,128)}', space=vmem, size = 0x200, scoped, tag = 'scratch operand']
  #allocation5 [shape = 'f32[1,128]{1,0:T(1,128)}', space=vmem, size = 0x200, scoped, tag = 'scratch operand']
  #allocation6 [shape = 'f32[1,1]{1,0:T(1,128)}', space=vmem, size = 0x200, scoped, tag = 'scratch operand']
  #allocation7 [shape = 'f32[1,1]{1,0:T(1,128)}', space=vmem, size = 0x200, scoped, tag = 'scratch operand']
  #allocation8 [shape = 's32[1,1]{1,0:T(1,128)}', space=vmem, size = 0x200, scoped, tag = 'scratch operand']
  #allocation9 [shape = 's32[1,1]{1,0:T(1,128)}', space=vmem, size = 0x200, scoped, tag = 'scratch operand']
  #allocation10 [shape = 's32[1,1]{1,0:T(1,128)}', space=vmem, size = 0x200, scoped, tag = 'scratch operand']
  #allocation11 [shape = 's32[1,1]{1,0:T(1,128)}', space=vmem, size = 0x200, scoped, tag = 'scratch operand']
  %s0 = inlined_call_operand.hbm [shape: f32[1,128], index: 0, kind: input, shape index: {}]
  %s1 = inlined_call_operand.hbm [shape: f32[1,1], index: 1, kind: output, shape index: {0}]
  %s2 = inlined_call_operand.hbm [shape: f32[1,1], index: 2, kind: output, shape index: {1}]
  %3 = xla_tuple %s1, %s2
  %s4 = sld [smem:[#allocation0]]
  $region44: #{tpu_custom_call.1} parent=0
    _
  %s6 = ssub.s32 1, %s4
  %s7 = scalar_select 0, %s6, %s4
  $region1: #{tpu_custom_call.1} parent=0
    #allocation12 [shape = 'u8[512]{0}', space=vmem, size = 0x400, scoped, tag = 'input window, operand 0, single buffered']
    #allocation13 [shape = 's32[1]{0}', space=sflag, size = 0x4, scoped, tag = 'scoped memory for tpu_custom_call.1']
    #allocation14 [shape = 's32[1]{0}', space=sflag, size = 0x4, scoped, tag = 'scoped memory for tpu_custom_call.1']
    #allocation15 [shape = 'u8[512]{0}', space=vmem, size = 0x400, scoped, tag = 'output window, operand 0, single buffered']
    #allocation16 [shape = 'u8[512]{0}', space=vmem, size = 0x400, scoped, tag = 'output window, operand 1, single buffered']
    #allocation17 [shape = 's32[1]{0}', space=sflag, size = 0x4, scoped, tag = 'scoped memory for tpu_custom_call.1']
    %8 = vsyncpa [#allocation13], 0
    %9 = vsyncpa [#allocation14], 0
    %10 = vsyncpa [#allocation17], 0
    // Predicated region
    $region2: #{tpu_custom_call.1} parent=1 // pred_check
      _
    $region3: #{tpu_custom_call.1} parent=1 // pred_check_branch
      %12 = sbr.rel (0) target = $region5
    $region4: #{tpu_custom_call.1} parent=1 // pred_region
      %s14 = ssub.s32 16, 16
      %15 = vsyncadd [#allocation13], %s14
      %s17 = sshll.u32 [#allocation12], 4
      %s18 = int_to_ptr.vmem [resolvable:$true] %s17
      %20 = dma.hbm_to_vmem [thread:$0]  %s0, 16, %s18, [#allocation13]
    $region5: #{tpu_custom_call.1} parent=1 // pred_fallthru
      _
    // Predicated region
    $region6: #{tpu_custom_call.1} parent=1 // pred_check
      _
    $region7: #{tpu_custom_call.1} parent=1 // pred_check_branch
      %22 = sbr.rel (0) target = $region9
    $region8: #{tpu_custom_call.1} parent=1 // pred_region
      %23 = dma.done [#allocation13], 16
    $region9: #{tpu_custom_call.1} parent=1 // pred_fallthru
      _
    %v24 = vlaneseq
    %v25 = vand.u32 %v24, 127
    %vm26 = vcmp.lt.s32.totalorder %v25, 8
    %vm27 = vcmp.ge.s32.totalorder %v25, 8
    %vm28 = vcmp.lt.s32.totalorder %v25, 16
    %vm29 = vmand %vm27, %vm28
    %v30 = vsel %vm26, 5.656854, -1.0
    %v31 = vsel %vm26, -1.0, 1.0
    %v32 = vsel %vm26, 0.14142136, 0.5
    %v33 = vld [vmem:[#allocation12] sm:$0x1]
    %34 = vst [vmem:[#allocation2] sm:$0x1] 0.0
    %35 = vst [vmem:[#allocation3] sm:$0x1] 0.0
    %36 = vst [vmem:[#allocation4] sm:$0x1] 0.0
    %37 = vst [vmem:[#allocation5] sm:$0x1] 0.0
    %vm38 = vcmask 0
    %39 = vst.msk [vmem:[#allocation6] sm:$0x1] %vm38, inf
    %40 = vst.msk [vmem:[#allocation7] sm:$0x1] %vm38, inf
    %41 = vst.msk [vmem:[#allocation8] sm:$0x1] %vm38, 0
    %42 = vst.msk [vmem:[#allocation9] sm:$0x1] %vm38, 0
    %43 = vst.msk [vmem:[#allocation10] sm:$0x1] %vm38, 0
    %44 = vst.msk [vmem:[#allocation11] sm:$0x1] %vm38, 0
    loop: start=0, step=1, limit=50
    $region10: #{tpu_custom_call.1} parent=1 // loop_pre_header
      _
    $region11: #{tpu_custom_call.1} parent=1 // loop_header
      %s46 = sphi 0, %s50
      %p47 = scmp.ge.s32.totalorder %s46, 50
    $region12: #{tpu_custom_call.1} parent=1 // loop_header_branch
      %49 = sbr.rel (%p47) target = $region16
    $region13: #{tpu_custom_call.1} parent=1 // loop_body
      %v51 = vld [vmem:[#allocation10] sm:$0x1]
      %s52 = vtos %v51
      %p53 = scmp.gt.s32.totalorder %s52, 0
      %v54 = vld [vmem:[#allocation11] sm:$0x1]
      %s55 = vtos %v54
      %p56 = scmp.gt.s32.totalorder %s55, 0
      %p57 = pnand %p53, %p56
      %p58 = pneg %p57
      %p59 = pneg %p58
      // Predicated region
      $region17: #{tpu_custom_call.1} parent=13 // pred_check
        _
      $region18: #{tpu_custom_call.1} parent=13 // pred_check_branch
        %61 = sbr.rel (%p58) target = $region20
      $region19: #{tpu_custom_call.1} parent=13 // pred_region
        %v62 = vld [vmem:[#allocation2] sm:$0x1]
        %v63 = vld [vmem:[#allocation3] sm:$0x1]
        %v64 = vld [vmem:[#allocation4] sm:$0x1]
        %v65 = vld [vmem:[#allocation5] sm:$0x1]
        %v66 = vld [vmem:[#allocation6] sm:$0x1]
        %v67 = vld [vmem:[#allocation7] sm:$0x1]
        %v68 = vld [vmem:[#allocation8] sm:$0x1]
        %v69 = vld [vmem:[#allocation9] sm:$0x1]
        %v70 = vld [vmem:[#allocation10] sm:$0x1]
        %v71 = vld [vmem:[#allocation11] sm:$0x1]
        loop: start=0, step=1, limit=4
        $region21: #{tpu_custom_call.1} parent=19 // loop_pre_header
          _
        $region22: #{tpu_custom_call.1} parent=19 // loop_header
          %s73 = sphi 0, %s77
          %p74 = scmp.ge.s32.totalorder %s73, 4
          %v78 = vphi %v62, %v593
          %v79 = vphi %v63, %v594
          %v80 = vphi %v64, %v611
          %v81 = vphi %v65, %v612
          %v82 = vphi %v66, %v629
          %v83 = vphi %v67, %v641
          %v84 = vphi %v68, %v630
          %v85 = vphi %v69, %v642
          %v86 = vphi %v70, %v632
          %v87 = vphi %v71, %v644
        $region23: #{tpu_custom_call.1} parent=19 // loop_header_branch
          %76 = sbr.rel (%p74) target = $region27
        $region24: #{tpu_custom_call.1} parent=19 // loop_body
          %v88 = vadd.f32 %v79, 0.7
          %v89 = vrcp.pop %v88
          %v90 = vmul.f32 %v89, %v89
          %v91 = vmul.f32 %v30, %v78
          %v92 = vadd.f32 %v33, %v91
          %v93 = vmul.f32 %v92, %v92
          %v94 = vmul.f32 %v78, 32.0
          %v95 = vmul.f32 %v94, %v78
          %v96 = vsub.f32 0.640001, %v95
          %v97 = vmul.f32 %v79, %v79
          %v98 = vsub.f32 %v96, %v97
          %v99 = vmax.f32 %v98, 0.0
          %v100 = vmul.f32 %v99, 0.032258064
          %v101 = vrsqrt.pop %v100
          %v102 = vmul.f32 %v100, %v101
          %vm103 = vcmp.eq.f32.partialorder %v100, inf
          %v104 = vsel %vm103, %v100, %v102
          %vm105 = vcmp.eq.f32.partialorder %v100, 0.0
          %v106 = vand.u32 %v100, 2147483648
          %v107 = vsel %vm105, %v106, %v104
          %v108 = vadd.f32 %v107, 0.7
          %v109 = vmul.f32 %v107, %v108
          %v110 = vrcp.pop %v109
          %v111 = vlog2.pop %v88
          %v112 = vmul.f32 %v111, 0.6931472
          %v113 = vmul.f32 %v93, 0.5
          %v114 = vmul.f32 %v113, %v90
          %v115 = vadd.f32 %v112, %v114
          %v116 = vmul.f32 %v31, %v115
          %v117 = vlog2.pop %v108
          %v118 = vmul.f32 %v117, 0.6931472
          %v119 = vmul.f32 %v118, -31.0
          %v120 = vsel %vm26, %v119, -11.056923
          %v121 = vadd.f32 %v116, %v120
          %v122 = vmul.f32 %v31, %v30
          %v123 = vmul.f32 %v122, %v92
          %v124 = vmul.f32 %v123, %v90
          %v125 = vmul.f32 %v78, -32.0
          %v126 = vmul.f32 %v125, %v110
          %v127 = vsel %vm26, %v126, 0.0
          %v128 = vadd.f32 %v124, %v127
          %v129 = vmul.f32 %v93, %v90
          %v130 = vmul.f32 %v129, %v89
          %v131 = vsub.f32 %v89, %v130
          %v132 = vmul.f32 %v31, %v131
          %v133 = vmul.f32 %v79, %v110
          %v134 = vsel %vm26, %v133, 0.0
          %v135 = vadd.f32 %v132, %v134
          %v136 = vmul.f32 %v128, 0.031622775
          %v137 = vsub.f32 %v78, %v136
          %v138 = vmax.f32 %v137, 0.0
          %v139 = vmul.f32 %v135, 0.031622775
          %v140 = vsub.f32 %v79, %v139
          %v141 = vmax.f32 %v140, 0.0
          %v142 = vmul.f32 %v138, %v138
          %v143 = vmul.f32 %v141, %v141
          %v144 = vadd.f32 %v142, %v143
          %v145 = vrsqrt.pop %v144
          %v146 = vmul.f32 %v32, %v145
          %v147 = vmin.f32 %v146, 1.0
          %v148 = vmul.f32 %v138, %v147
          %v149 = vmul.f32 %v141, %v147
          %150 = vset.pattern.permute.xlu0 0
          %151 = vperm.xlu0 %150, %v86
          %v152 = vpop.permute.xlu0 %151
          %v153 = vlaneseq
          %v154 = vshrl.u32 %v153, 7
          %v155 = vsub.s32 0, %v154
          %v156 = vrot.slane %v152, %v155
          %157 = vset.pattern.permute.xlu0 0
          %158 = vperm.xlu0 %157, %v87
          %v159 = vpop.permute.xlu0 %158
          %v160 = vlaneseq
          %v161 = vshrl.u32 %v160, 7
          %v162 = vsub.s32 0, %v161
          %v163 = vrot.slane %v159, %v162
          %v164 = vsel %vm26, %v156, %v163
          %vm165 = vcmp.gt.s32.totalorder %v164, 0
          %v166 = vsel %vm165, %v80, %v148
          %v167 = vsel %vm165, %v81, %v149
          %v168 = vsel %vm26, %v121, 0.0
          %vm169 = vcmask 1040384
          %v170 = vsel %vm169, %v168, 0.0
          %171 = vadd.xlane.f32.xlu0 %v170
          %v172 = vpop.xlane.xlu0 %171
          %v173 = vsel %vm29, %v121, 0.0
          %v174 = vsel %vm169, %v173, 0.0
          %175 = vadd.xlane.f32.xlu0 %v174
          %v176 = vpop.xlane.xlu0 %175
          %v177 = vsub.f32 %v82, %v172
          %vm178 = vcmp.le.f32.partialorder %v177, 1e-10
          %v179 = vadd.s32 %v84, 1
          %v180 = vsel %vm178, %v179, 0
          %vm181 = vcmp.ge.s32.totalorder %v180, 10
          %v182 = vmin.f32 %v82, %v172
          %v183 = vsel %vm181, %v82, %v182
          %vm184 = vcmp.eq.s32.totalorder %v86, 0
          %v185 = vsel %vm184, %v183, %v82
          %v186 = vsel %vm184, %v180, %v84
          %v187 = vsel %vm181, 1, 0
          %v188 = vsel %vm184, %v187, %v86
          %v189 = vsub.f32 %v83, %v176
          %vm190 = vcmp.le.f32.partialorder %v189, 1e-10
          %v191 = vadd.s32 %v85, 1
          %v192 = vsel %vm190, %v191, 0
          %vm193 = vcmp.ge.s32.totalorder %v192, 10
          %v194 = vmin.f32 %v83, %v176
          %v195 = vsel %vm193, %v83, %v194
          %vm196 = vcmp.eq.s32.totalorder %v87, 0
          %v197 = vsel %vm196, %v195, %v83
          %v198 = vsel %vm196, %v192, %v85
          %v199 = vsel %vm193, 1, 0
          %v200 = vsel %vm196, %v199, %v87
          %v201 = vadd.f32 %v149, 0.7
          %v202 = vrcp.pop %v201
          %v203 = vmul.f32 %v202, %v202
          %v204 = vmul.f32 %v30, %v148
          %v205 = vadd.f32 %v33, %v204
          %v206 = vmul.f32 %v205, %v205
          %v207 = vmul.f32 %v148, 32.0
          %v208 = vmul.f32 %v207, %v148
          %v209 = vsub.f32 0.640001, %v208
          %v210 = vmul.f32 %v149, %v149
          %v211 = vsub.f32 %v209, %v210
          %v212 = vmax.f32 %v211, 0.0
          %v213 = vmul.f32 %v212, 0.032258064
          %v214 = vrsqrt.pop %v213
          %v215 = vmul.f32 %v213, %v214
          %vm216 = vcmp.eq.f32.partialorder %v213, inf
          %v217 = vsel %vm216, %v213, %v215
          %vm218 = vcmp.eq.f32.partialorder %v213, 0.0
          %v219 = vand.u32 %v213, 2147483648
          %v220 = vsel %vm218, %v219, %v217
          %v221 = vadd.f32 %v220, 0.7
          %v222 = vmul.f32 %v220, %v221
          %v223 = vrcp.pop %v222
          %v224 = vlog2.pop %v201
          %v225 = vmul.f32 %v224, 0.6931472
          %v226 = vmul.f32 %v206, 0.5
          %v227 = vmul.f32 %v226, %v203
          %v228 = vadd.f32 %v225, %v227
          %v229 = vmul.f32 %v31, %v228
          %v230 = vlog2.pop %v221
          %v231 = vmul.f32 %v230, 0.6931472
          %v232 = vmul.f32 %v231, -31.0
          %v233 = vsel %vm26, %v232, -11.056923
          %v234 = vadd.f32 %v229, %v233
          %v235 = vmul.f32 %v122, %v205
          %v236 = vmul.f32 %v235, %v203
          %v237 = vmul.f32 %v148, -32.0
          %v238 = vmul.f32 %v237, %v223
          %v239 = vsel %vm26, %v238, 0.0
          %v240 = vadd.f32 %v236, %v239
          %v241 = vmul.f32 %v206, %v203
          %v242 = vmul.f32 %v241, %v202
          %v243 = vsub.f32 %v202, %v242
          %v244 = vmul.f32 %v31, %v243
          %v245 = vmul.f32 %v149, %v223
          %v246 = vsel %vm26, %v245, 0.0
          %v247 = vadd.f32 %v244, %v246
          %v248 = vmul.f32 %v240, 0.031622775
          %v249 = vsub.f32 %v148, %v248
          %v250 = vmax.f32 %v249, 0.0
          %v251 = vmul.f32 %v247, 0.031622775
          %v252 = vsub.f32 %v149, %v251
          %v253 = vmax.f32 %v252, 0.0
          %v254 = vmul.f32 %v250, %v250
          %v255 = vmul.f32 %v253, %v253
          %v256 = vadd.f32 %v254, %v255
          %v257 = vrsqrt.pop %v256
          %v258 = vmul.f32 %v32, %v257
          %v259 = vmin.f32 %v258, 1.0
          %v260 = vmul.f32 %v250, %v259
          %v261 = vmul.f32 %v253, %v259
          %262 = vset.pattern.permute.xlu0 0
          %263 = vperm.xlu0 %262, %v188
          %v264 = vpop.permute.xlu0 %263
          %v265 = vlaneseq
          %v266 = vshrl.u32 %v265, 7
          %v267 = vsub.s32 0, %v266
          %v268 = vrot.slane %v264, %v267
          %269 = vset.pattern.permute.xlu0 0
          %270 = vperm.xlu0 %269, %v200
          %v271 = vpop.permute.xlu0 %270
          %v272 = vlaneseq
          %v273 = vshrl.u32 %v272, 7
          %v274 = vsub.s32 0, %v273
          %v275 = vrot.slane %v271, %v274
          %v276 = vsel %vm26, %v268, %v275
          %vm277 = vcmp.gt.s32.totalorder %v276, 0
          %v278 = vsel %vm277, %v166, %v260
          %v279 = vsel %vm277, %v167, %v261
          %v280 = vsel %vm26, %v234, 0.0
          %v281 = vsel %vm169, %v280, 0.0
          %282 = vadd.xlane.f32.xlu0 %v281
          %v283 = vpop.xlane.xlu0 %282
          %v284 = vsel %vm29, %v234, 0.0
          %v285 = vsel %vm169, %v284, 0.0
          %286 = vadd.xlane.f32.xlu0 %v285
          %v287 = vpop.xlane.xlu0 %286
          %v288 = vsub.f32 %v185, %v283
          %vm289 = vcmp.le.f32.partialorder %v288, 1e-10
          %v290 = vadd.s32 %v186, 1
          %v291 = vsel %vm289, %v290, 0
          %vm292 = vcmp.ge.s32.totalorder %v291, 10
          %v293 = vmin.f32 %v185, %v283
          %v294 = vsel %vm292, %v185, %v293
          %vm295 = vcmp.eq.s32.totalorder %v188, 0
          %v296 = vsel %vm295, %v294, %v185
          %v297 = vsel %vm295, %v291, %v186
          %v298 = vsel %vm292, 1, 0
          %v299 = vsel %vm295, %v298, %v188
          %v300 = vsub.f32 %v197, %v287
          %vm301 = vcmp.le.f32.partialorder %v300, 1e-10
          %v302 = vadd.s32 %v198, 1
          %v303 = vsel %vm301, %v302, 0
          %vm304 = vcmp.ge.s32.totalorder %v303, 10
          %v305 = vmin.f32 %v197, %v287
          %v306 = vsel %vm304, %v197, %v305
          %vm307 = vcmp.eq.s32.totalorder %v200, 0
          %v308 = vsel %vm307, %v306, %v197
          %v309 = vsel %vm307, %v303, %v198
          %v310 = vsel %vm304, 1, 0
          %v311 = vsel %vm307, %v310, %v200
          %v312 = vadd.f32 %v261, 0.7
          %v313 = vrcp.pop %v312
          %v314 = vmul.f32 %v313, %v313
          %v315 = vmul.f32 %v30, %v260
          %v316 = vadd.f32 %v33, %v315
          %v317 = vmul.f32 %v316, %v316
          %v318 = vmul.f32 %v260, 32.0
          %v319 = vmul.f32 %v318, %v260
          %v320 = vsub.f32 0.640001, %v319
          %v321 = vmul.f32 %v261, %v261
          %v322 = vsub.f32 %v320, %v321
          %v323 = vmax.f32 %v322, 0.0
          %v324 = vmul.f32 %v323, 0.032258064
          %v325 = vrsqrt.pop %v324
          %v326 = vmul.f32 %v324, %v325
          %vm327 = vcmp.eq.f32.partialorder %v324, inf
          %v328 = vsel %vm327, %v324, %v326
          %vm329 = vcmp.eq.f32.partialorder %v324, 0.0
          %v330 = vand.u32 %v324, 2147483648
          %v331 = vsel %vm329, %v330, %v328
          %v332 = vadd.f32 %v331, 0.7
          %v333 = vmul.f32 %v331, %v332
          %v334 = vrcp.pop %v333
          %v335 = vlog2.pop %v312
          %v336 = vmul.f32 %v335, 0.6931472
          %v337 = vmul.f32 %v317, 0.5
          %v338 = vmul.f32 %v337, %v314
          %v339 = vadd.f32 %v336, %v338
          %v340 = vmul.f32 %v31, %v339
          %v341 = vlog2.pop %v332
          %v342 = vmul.f32 %v341, 0.6931472
          %v343 = vmul.f32 %v342, -31.0
          %v344 = vsel %vm26, %v343, -11.056923
          %v345 = vadd.f32 %v340, %v344
          %v346 = vmul.f32 %v122, %v316
          %v347 = vmul.f32 %v346, %v314
          %v348 = vmul.f32 %v260, -32.0
          %v349 = vmul.f32 %v348, %v334
          %v350 = vsel %vm26, %v349, 0.0
          %v351 = vadd.f32 %v347, %v350
          %v352 = vmul.f32 %v317, %v314
          %v353 = vmul.f32 %v352, %v313
          %v354 = vsub.f32 %v313, %v353
          %v355 = vmul.f32 %v31, %v354
          %v356 = vmul.f32 %v261, %v334
          %v357 = vsel %vm26, %v356, 0.0
          %v358 = vadd.f32 %v355, %v357
          %v359 = vmul.f32 %v351, 0.031622775
          %v360 = vsub.f32 %v260, %v359
          %v361 = vmax.f32 %v360, 0.0
          %v362 = vmul.f32 %v358, 0.031622775
          %v363 = vsub.f32 %v261, %v362
          %v364 = vmax.f32 %v363, 0.0
          %v365 = vmul.f32 %v361, %v361
          %v366 = vmul.f32 %v364, %v364
          %v367 = vadd.f32 %v365, %v366
          %v368 = vrsqrt.pop %v367
          %v369 = vmul.f32 %v32, %v368
          %v370 = vmin.f32 %v369, 1.0
          %v371 = vmul.f32 %v361, %v370
          %v372 = vmul.f32 %v364, %v370
          %373 = vset.pattern.permute.xlu0 0
          %374 = vperm.xlu0 %373, %v299
          %v375 = vpop.permute.xlu0 %374
          %v376 = vlaneseq
          %v377 = vshrl.u32 %v376, 7
          %v378 = vsub.s32 0, %v377
          %v379 = vrot.slane %v375, %v378
          %380 = vset.pattern.permute.xlu0 0
          %381 = vperm.xlu0 %380, %v311
          %v382 = vpop.permute.xlu0 %381
          %v383 = vlaneseq
          %v384 = vshrl.u32 %v383, 7
          %v385 = vsub.s32 0, %v384
          %v386 = vrot.slane %v382, %v385
          %v387 = vsel %vm26, %v379, %v386
          %vm388 = vcmp.gt.s32.totalorder %v387, 0
          %v389 = vsel %vm388, %v278, %v371
          %v390 = vsel %vm388, %v279, %v372
          %v391 = vsel %vm26, %v345, 0.0
          %v392 = vsel %vm169, %v391, 0.0
          %393 = vadd.xlane.f32.xlu0 %v392
          %v394 = vpop.xlane.xlu0 %393
          %v395 = vsel %vm29, %v345, 0.0
          %v396 = vsel %vm169, %v395, 0.0
          %397 = vadd.xlane.f32.xlu0 %v396
          %v398 = vpop.xlane.xlu0 %397
          %v399 = vsub.f32 %v296, %v394
          %vm400 = vcmp.le.f32.partialorder %v399, 1e-10
          %v401 = vadd.s32 %v297, 1
          %v402 = vsel %vm400, %v401, 0
          %vm403 = vcmp.ge.s32.totalorder %v402, 10
          %v404 = vmin.f32 %v296, %v394
          %v405 = vsel %vm403, %v296, %v404
          %vm406 = vcmp.eq.s32.totalorder %v299, 0
          %v407 = vsel %vm406, %v405, %v296
          %v408 = vsel %vm406, %v402, %v297
          %v409 = vsel %vm403, 1, 0
          %v410 = vsel %vm406, %v409, %v299
          %v411 = vsub.f32 %v308, %v398
          %vm412 = vcmp.le.f32.partialorder %v411, 1e-10
          %v413 = vadd.s32 %v309, 1
          %v414 = vsel %vm412, %v413, 0
          %vm415 = vcmp.ge.s32.totalorder %v414, 10
          %v416 = vmin.f32 %v308, %v398
          %v417 = vsel %vm415, %v308, %v416
          %vm418 = vcmp.eq.s32.totalorder %v311, 0
          %v419 = vsel %vm418, %v417, %v308
          %v420 = vsel %vm418, %v414, %v309
          %v421 = vsel %vm415, 1, 0
          %v422 = vsel %vm418, %v421, %v311
          %v423 = vadd.f32 %v372, 0.7
          %v424 = vrcp.pop %v423
          %v425 = vmul.f32 %v424, %v424
          %v426 = vmul.f32 %v30, %v371
          %v427 = vadd.f32 %v33, %v426
          %v428 = vmul.f32 %v427, %v427
          %v429 = vmul.f32 %v371, 32.0
          %v430 = vmul.f32 %v429, %v371
          %v431 = vsub.f32 0.640001, %v430
          %v432 = vmul.f32 %v372, %v372
          %v433 = vsub.f32 %v431, %v432
          %v434 = vmax.f32 %v433, 0.0
          %v435 = vmul.f32 %v434, 0.032258064
          %v436 = vrsqrt.pop %v435
          %v437 = vmul.f32 %v435, %v436
          %vm438 = vcmp.eq.f32.partialorder %v435, inf
          %v439 = vsel %vm438, %v435, %v437
          %vm440 = vcmp.eq.f32.partialorder %v435, 0.0
          %v441 = vand.u32 %v435, 2147483648
          %v442 = vsel %vm440, %v441, %v439
          %v443 = vadd.f32 %v442, 0.7
          %v444 = vmul.f32 %v442, %v443
          %v445 = vrcp.pop %v444
          %v446 = vlog2.pop %v423
          %v447 = vmul.f32 %v446, 0.6931472
          %v448 = vmul.f32 %v428, 0.5
          %v449 = vmul.f32 %v448, %v425
          %v450 = vadd.f32 %v447, %v449
          %v451 = vmul.f32 %v31, %v450
          %v452 = vlog2.pop %v443
          %v453 = vmul.f32 %v452, 0.6931472
          %v454 = vmul.f32 %v453, -31.0
          %v455 = vsel %vm26, %v454, -11.056923
          %v456 = vadd.f32 %v451, %v455
          %v457 = vmul.f32 %v122, %v427
          %v458 = vmul.f32 %v457, %v425
          %v459 = vmul.f32 %v371, -32.0
          %v460 = vmul.f32 %v459, %v445
          %v461 = vsel %vm26, %v460, 0.0
          %v462 = vadd.f32 %v458, %v461
          %v463 = vmul.f32 %v428, %v425
          %v464 = vmul.f32 %v463, %v424
          %v465 = vsub.f32 %v424, %v464
          %v466 = vmul.f32 %v31, %v465
          %v467 = vmul.f32 %v372, %v445
          %v468 = vsel %vm26, %v467, 0.0
          %v469 = vadd.f32 %v466, %v468
          %v470 = vmul.f32 %v462, 0.031622775
          %v471 = vsub.f32 %v371, %v470
          %v472 = vmax.f32 %v471, 0.0
          %v473 = vmul.f32 %v469, 0.031622775
          %v474 = vsub.f32 %v372, %v473
          %v475 = vmax.f32 %v474, 0.0
          %v476 = vmul.f32 %v472, %v472
          %v477 = vmul.f32 %v475, %v475
          %v478 = vadd.f32 %v476, %v477
          %v479 = vrsqrt.pop %v478
          %v480 = vmul.f32 %v32, %v479
          %v481 = vmin.f32 %v480, 1.0
          %v482 = vmul.f32 %v472, %v481
          %v483 = vmul.f32 %v475, %v481
          %484 = vset.pattern.permute.xlu0 0
          %485 = vperm.xlu0 %484, %v410
          %v486 = vpop.permute.xlu0 %485
          %v487 = vlaneseq
          %v488 = vshrl.u32 %v487, 7
          %v489 = vsub.s32 0, %v488
          %v490 = vrot.slane %v486, %v489
          %491 = vset.pattern.permute.xlu0 0
          %492 = vperm.xlu0 %491, %v422
          %v493 = vpop.permute.xlu0 %492
          %v494 = vlaneseq
          %v495 = vshrl.u32 %v494, 7
          %v496 = vsub.s32 0, %v495
          %v497 = vrot.slane %v493, %v496
          %v498 = vsel %vm26, %v490, %v497
          %vm499 = vcmp.gt.s32.totalorder %v498, 0
          %v500 = vsel %vm499, %v389, %v482
          %v501 = vsel %vm499, %v390, %v483
          %v502 = vsel %vm26, %v456, 0.0
          %v503 = vsel %vm169, %v502, 0.0
          %504 = vadd.xlane.f32.xlu0 %v503
          %v505 = vpop.xlane.xlu0 %504
          %v506 = vsel %vm29, %v456, 0.0
          %v507 = vsel %vm169, %v506, 0.0
          %508 = vadd.xlane.f32.xlu0 %v507
          %v509 = vpop.xlane.xlu0 %508
          %v510 = vsub.f32 %v407, %v505
          %vm511 = vcmp.le.f32.partialorder %v510, 1e-10
          %v512 = vadd.s32 %v408, 1
          %v513 = vsel %vm511, %v512, 0
          %vm514 = vcmp.ge.s32.totalorder %v513, 10
          %v515 = vmin.f32 %v407, %v505
          %v516 = vsel %vm514, %v407, %v515
          %vm517 = vcmp.eq.s32.totalorder %v410, 0
          %v518 = vsel %vm517, %v516, %v407
          %v519 = vsel %vm517, %v513, %v408
          %v520 = vsel %vm514, 1, 0
          %v521 = vsel %vm517, %v520, %v410
          %v522 = vsub.f32 %v419, %v509
          %vm523 = vcmp.le.f32.partialorder %v522, 1e-10
          %v524 = vadd.s32 %v420, 1
          %v525 = vsel %vm523, %v524, 0
          %vm526 = vcmp.ge.s32.totalorder %v525, 10
          %v527 = vmin.f32 %v419, %v509
          %v528 = vsel %vm526, %v419, %v527
          %vm529 = vcmp.eq.s32.totalorder %v422, 0
          %v530 = vsel %vm529, %v528, %v419
          %v531 = vsel %vm529, %v525, %v420
          %v532 = vsel %vm526, 1, 0
          %v533 = vsel %vm529, %v532, %v422
          %v534 = vadd.f32 %v483, 0.7
          %v535 = vrcp.pop %v534
          %v536 = vmul.f32 %v535, %v535
          %v537 = vmul.f32 %v30, %v482
          %v538 = vadd.f32 %v33, %v537
          %v539 = vmul.f32 %v538, %v538
          %v540 = vmul.f32 %v482, 32.0
          %v541 = vmul.f32 %v540, %v482
          %v542 = vsub.f32 0.640001, %v541
          %v543 = vmul.f32 %v483, %v483
          %v544 = vsub.f32 %v542, %v543
          %v545 = vmax.f32 %v544, 0.0
          %v546 = vmul.f32 %v545, 0.032258064
          %v547 = vrsqrt.pop %v546
          %v548 = vmul.f32 %v546, %v547
          %vm549 = vcmp.eq.f32.partialorder %v546, inf
          %v550 = vsel %vm549, %v546, %v548
          %vm551 = vcmp.eq.f32.partialorder %v546, 0.0
          %v552 = vand.u32 %v546, 2147483648
          %v553 = vsel %vm551, %v552, %v550
          %v554 = vadd.f32 %v553, 0.7
          %v555 = vmul.f32 %v553, %v554
          %v556 = vrcp.pop %v555
          %v557 = vlog2.pop %v534
          %v558 = vmul.f32 %v557, 0.6931472
          %v559 = vmul.f32 %v539, 0.5
          %v560 = vmul.f32 %v559, %v536
          %v561 = vadd.f32 %v558, %v560
          %v562 = vmul.f32 %v31, %v561
          %v563 = vlog2.pop %v554
          %v564 = vmul.f32 %v563, 0.6931472
          %v565 = vmul.f32 %v564, -31.0
          %v566 = vsel %vm26, %v565, -11.056923
          %v567 = vadd.f32 %v562, %v566
          %v568 = vmul.f32 %v122, %v538
          %v569 = vmul.f32 %v568, %v536
          %v570 = vmul.f32 %v482, -32.0
          %v571 = vmul.f32 %v570, %v556
          %v572 = vsel %vm26, %v571, 0.0
          %v573 = vadd.f32 %v569, %v572
          %v574 = vmul.f32 %v539, %v536
          %v575 = vmul.f32 %v574, %v535
          %v576 = vsub.f32 %v535, %v575
          %v577 = vmul.f32 %v31, %v576
          %v578 = vmul.f32 %v483, %v556
          %v579 = vsel %vm26, %v578, 0.0
          %v580 = vadd.f32 %v577, %v579
          %v581 = vmul.f32 %v573, 0.031622775
          %v582 = vsub.f32 %v482, %v581
          %v583 = vmax.f32 %v582, 0.0
          %v584 = vmul.f32 %v580, 0.031622775
          %v585 = vsub.f32 %v483, %v584
          %v586 = vmax.f32 %v585, 0.0
          %v587 = vmul.f32 %v583, %v583
          %v588 = vmul.f32 %v586, %v586
          %v589 = vadd.f32 %v587, %v588
          %v590 = vrsqrt.pop %v589
          %v591 = vmul.f32 %v32, %v590
          %v592 = vmin.f32 %v591, 1.0
          %v593 = vmul.f32 %v583, %v592
          %v594 = vmul.f32 %v586, %v592
          %595 = vset.pattern.permute.xlu0 0
          %596 = vperm.xlu0 %595, %v521
          %v597 = vpop.permute.xlu0 %596
          %v598 = vlaneseq
          %v599 = vshrl.u32 %v598, 7
          %v600 = vsub.s32 0, %v599
          %v601 = vrot.slane %v597, %v600
          %602 = vset.pattern.permute.xlu0 0
          %603 = vperm.xlu0 %602, %v533
          %v604 = vpop.permute.xlu0 %603
          %v605 = vlaneseq
          %v606 = vshrl.u32 %v605, 7
          %v607 = vsub.s32 0, %v606
          %v608 = vrot.slane %v604, %v607
          %v609 = vsel %vm26, %v601, %v608
          %vm610 = vcmp.gt.s32.totalorder %v609, 0
          %v611 = vsel %vm610, %v500, %v593
          %v612 = vsel %vm610, %v501, %v594
          %v613 = vsel %vm26, %v567, 0.0
          %v614 = vsel %vm169, %v613, 0.0
          %615 = vadd.xlane.f32.xlu0 %v614
          %v616 = vpop.xlane.xlu0 %615
          %v617 = vsel %vm29, %v567, 0.0
          %v618 = vsel %vm169, %v617, 0.0
          %619 = vadd.xlane.f32.xlu0 %v618
          %v620 = vpop.xlane.xlu0 %619
          %v621 = vsub.f32 %v518, %v616
          %vm622 = vcmp.le.f32.partialorder %v621, 1e-10
          %v623 = vadd.s32 %v519, 1
          %v624 = vsel %vm622, %v623, 0
          %vm625 = vcmp.ge.s32.totalorder %v624, 10
          %v626 = vmin.f32 %v518, %v616
          %v627 = vsel %vm625, %v518, %v626
          %vm628 = vcmp.eq.s32.totalorder %v521, 0
          %v629 = vsel %vm628, %v627, %v518
          %v630 = vsel %vm628, %v624, %v519
          %v631 = vsel %vm625, 1, 0
          %v632 = vsel %vm628, %v631, %v521
          %v633 = vsub.f32 %v530, %v620
          %vm634 = vcmp.le.f32.partialorder %v633, 1e-10
          %v635 = vadd.s32 %v531, 1
          %v636 = vsel %vm634, %v635, 0
          %vm637 = vcmp.ge.s32.totalorder %v636, 10
          %v638 = vmin.f32 %v530, %v620
          %v639 = vsel %vm637, %v530, %v638
          %vm640 = vcmp.eq.s32.totalorder %v533, 0
          %v641 = vsel %vm640, %v639, %v530
          %v642 = vsel %vm640, %v636, %v531
          %v643 = vsel %vm637, 1, 0
          %v644 = vsel %vm640, %v643, %v533
        $region25: #{tpu_custom_call.1} parent=19 // loop_footer
          %s77 = sadd.s32 1, %s73
        $region26: #{tpu_custom_call.1} parent=19 // loop_footer_branch
          %72 = sbr.rel target = $region22
        $region27: #{tpu_custom_call.1} parent=19 // loop_exit
          _
        %645 = vst [vmem:[#allocation2] sm:$0x1] %v78
        %646 = vst [vmem:[#allocation3] sm:$0x1] %v79
        %647 = vst [vmem:[#allocation4] sm:$0x1] %v80
        %648 = vst [vmem:[#allocation5] sm:$0x1] %v81
        %649 = vst.msk [vmem:[#allocation6] sm:$0x1] %vm38, %v82
        %650 = vst.msk [vmem:[#allocation7] sm:$0x1] %vm38, %v83
        %651 = vst.msk [vmem:[#allocation8] sm:$0x1] %vm38, %v84
        %652 = vst.msk [vmem:[#allocation9] sm:$0x1] %vm38, %v85
        %653 = vst.msk [vmem:[#allocation10] sm:$0x1] %vm38, %v86
        %654 = vst.msk [vmem:[#allocation11] sm:$0x1] %vm38, %v87
      $region20: #{tpu_custom_call.1} parent=13 // pred_fallthru
        _
    $region14: #{tpu_custom_call.1} parent=1 // loop_footer
      %s50 = sadd.s32 1, %s46
    $region15: #{tpu_custom_call.1} parent=1 // loop_footer_branch
      %45 = sbr.rel target = $region11
    $region16: #{tpu_custom_call.1} parent=1 // loop_exit
      _
    %v655 = vld [vmem:[#allocation10] sm:$0x1]
    %v656 = vld [vmem:[#allocation11] sm:$0x1]
    %657 = vset.pattern.permute.xlu0 0
    %658 = vperm.xlu0 %657, %v655
    %v659 = vpop.permute.xlu0 %658
    %v660 = vlaneseq
    %v661 = vshrl.u32 %v660, 7
    %v662 = vsub.s32 0, %v661
    %v663 = vrot.slane %v659, %v662
    %664 = vset.pattern.permute.xlu0 0
    %665 = vperm.xlu0 %664, %v656
    %v666 = vpop.permute.xlu0 %665
    %v667 = vlaneseq
    %v668 = vshrl.u32 %v667, 7
    %v669 = vsub.s32 0, %v668
    %v670 = vrot.slane %v666, %v669
    %v671 = vsel %vm26, %v663, %v670
    %vm672 = vcmp.gt.s32.totalorder %v671, 0
    %v673 = vld [vmem:[#allocation4] sm:$0x1]
    %v674 = vld [vmem:[#allocation2] sm:$0x1]
    %v675 = vsel %vm672, %v673, %v674
    %v676 = vld [vmem:[#allocation5] sm:$0x1]
    %v677 = vld [vmem:[#allocation3] sm:$0x1]
    %v678 = vsel %vm672, %v676, %v677
    %v679 = vadd.f32 %v678, 0.7
    %v680 = vrcp.pop %v679
    %v681 = vmul.f32 1.0, %v680
    %v682 = vmul.f32 %v681, %v681
    %v683 = vmul.f32 %v30, %v675
    %v684 = vadd.f32 %v33, %v683
    %v685 = vmul.f32 %v684, %v684
    %v686 = vmul.f32 %v675, 32.0
    %v687 = vmul.f32 %v686, %v675
    %v688 = vsub.f32 0.640001, %v687
    %v689 = vmul.f32 %v678, %v678
    %v690 = vsub.f32 %v688, %v689
    %v691 = vmax.f32 %v690, 0.0
    %v692 = vmul.f32 %v691, 0.032258064
    %v693 = vrsqrt.pop %v692
    %v694 = vmul.f32 %v692, %v693
    %vm695 = vcmp.eq.f32.partialorder %v692, inf
    %v696 = vsel %vm695, %v692, %v694
    %vm697 = vcmp.eq.f32.partialorder %v692, 0.0
    %v698 = vand.u32 %v692, 2147483648
    %v699 = vsel %vm697, %v698, %v696
    %v700 = vadd.f32 %v699, 0.7
    %v701 = vlog2.pop %v679
    %v702 = vmul.f32 %v701, 0.6931472
    %v703 = vmul.f32 %v685, 0.5
    %v704 = vmul.f32 %v703, %v682
    %v705 = vadd.f32 %v702, %v704
    %v706 = vmul.f32 %v31, %v705
    %v707 = vlog2.pop %v700
    %v708 = vmul.f32 %v707, 0.6931472
    %v709 = vmul.f32 %v708, -31.0
    %v710 = vsel %vm26, %v709, -11.056923
    %v711 = vadd.f32 %v706, %v710
    %v712 = vsel %vm26, %v711, -inf
    %vm713 = vcmask 1040384
    %v714 = vsel %vm713, %v712, -inf
    %715 = vmax.xlane.f32.xlu0 %v714
    %v716 = vpop.xlane.xlu0 %715
    %v717 = vsub.f32 %v712, %v716
    %v718 = vmul.f32 %v717, 1.442695
    %v719 = vpow.pop %v718
    %v720 = vsel %vm713, %v719, 0.0
    %721 = vadd.xlane.f32.xlu0 %v720
    %v722 = vpop.xlane.xlu0 %721
    %v723 = vlog2.pop %v722
    %v724 = vmul.f32 %v723, 0.6931472
    %v725 = vadd.f32 %v716, %v724
    %726 = vst.msk [vmem:[#allocation15] sm:$0x1] %vm38, %v725
    %v727 = vsub.f32 0.0, %v711
    %v728 = vsel %vm29, %v727, -inf
    %v729 = vsel %vm713, %v728, -inf
    %730 = vmax.xlane.f32.xlu0 %v729
    %v731 = vpop.xlane.xlu0 %730
    %v732 = vsub.f32 %v728, %v731
    %v733 = vmul.f32 %v732, 1.442695
    %v734 = vpow.pop %v733
    %v735 = vsel %vm713, %v734, 0.0
    %736 = vadd.xlane.f32.xlu0 %v735
    %v737 = vpop.xlane.xlu0 %736
    %v738 = vlog2.pop %v737
    %v739 = vmul.f32 %v738, 0.6931472
    %v740 = vadd.f32 %v731, %v739
    %741 = vst.msk [vmem:[#allocation16] sm:$0x1] %vm38, %v740
    // Predicated region
    $region28: #{tpu_custom_call.1} parent=1 // pred_check
      _
    $region29: #{tpu_custom_call.1} parent=1 // pred_check_branch
      %743 = sbr.rel (0) target = $region31
    $region30: #{tpu_custom_call.1} parent=1 // pred_region
      %s745 = ssub.s32 16, 16
      %746 = vsyncadd [#allocation14], %s745
      %s748 = sshll.u32 [#allocation15], 4
      %s749 = int_to_ptr.vmem [resolvable:$true] %s748
      %751 = dma.vmem_to_hbm [thread:$0]  %s749, 16, %s1, [#allocation14]
    $region31: #{tpu_custom_call.1} parent=1 // pred_fallthru
      _
    // Predicated region
    $region32: #{tpu_custom_call.1} parent=1 // pred_check
      _
    $region33: #{tpu_custom_call.1} parent=1 // pred_check_branch
      %753 = sbr.rel (0) target = $region35
    $region34: #{tpu_custom_call.1} parent=1 // pred_region
      %s755 = ssub.s32 16, 16
      %756 = vsyncadd [#allocation17], %s755
      %s758 = sshll.u32 [#allocation16], 4
      %s759 = int_to_ptr.vmem [resolvable:$true] %s758
      %761 = dma.vmem_to_hbm [thread:$0]  %s759, 16, %s2, [#allocation17]
    $region35: #{tpu_custom_call.1} parent=1 // pred_fallthru
      _
    // Predicated region
    $region36: #{tpu_custom_call.1} parent=1 // pred_check
      _
    $region37: #{tpu_custom_call.1} parent=1 // pred_check_branch
      %763 = sbr.rel (0) target = $region39
    $region38: #{tpu_custom_call.1} parent=1 // pred_region
      %764 = dma.done [#allocation14], 16
    $region39: #{tpu_custom_call.1} parent=1 // pred_fallthru
      _
    // Predicated region
    $region40: #{tpu_custom_call.1} parent=1 // pred_check
      _
    $region41: #{tpu_custom_call.1} parent=1 // pred_check_branch
      %766 = sbr.rel (0) target = $region43
    $region42: #{tpu_custom_call.1} parent=1 // pred_region
      %767 = dma.done [#allocation17], 16
    $region43: #{tpu_custom_call.1} parent=1 // pred_fallthru
      _
    %768 = vsyncpa [#allocation13], 1
    %769 = vsyncpa [#allocation14], 1
    %770 = vsyncpa [#allocation17], 1

</llo_original>
